<compile_context>
chip_gen: v7x
topology: tpu7x:2x2x1
jax: 0.10.0
libtpu: 0.0.40
codegen_flags: <defaults>
</compile_context>

<pallas_src>
import jax
import jax.numpy as jnp
from jax.experimental import pallas as pl
from jax.experimental.pallas import tpu as pltpu


def _leaky_relu(x, slope=0.2):
    return jnp.where(x > 0, x, slope * x)


def _round_up(x, m):
    return (x + m - 1) // m * m


def disc_kernel(img_ref, lab_ref,
                w1_ref, b1_ref,
                w2_ref, b2_ref,
                wc_ref, bc_ref,
                wp_ref, wv_ref, bv_ref,
                cls_ref, val_ref):
    # Layer 1 / Layer 2: bf16 operands on the MXU, f32 accumulation, f32 VPU epilogue.
    h = jnp.dot(img_ref[...], w1_ref[...],
                preferred_element_type=jnp.float32) + b1_ref[...]
    h = _leaky_relu(h)
    h = jnp.dot(h.astype(jnp.bfloat16), w2_ref[...],
                preferred_element_type=jnp.float32) + b2_ref[...]
    h = _leaky_relu(h)                                        # (bm, hidden) f32

    # Classifier head: exactly (hidden, cp) — lane-dense matmul, dense store.
    cls_ref[...] = jnp.dot(h.astype(jnp.bfloat16), wc_ref[...],
                           preferred_element_type=jnp.float32) + bc_ref[...]

    # Validity head folded into the projection reduce:
    #   validity = sum((label @ Wp + wv_row) * h, axis=1) + bv
    var = jnp.dot(lab_ref[...], wp_ref[...],
                  preferred_element_type=jnp.float32) + wv_ref[...]
    prod_t = jnp.transpose(var * h)                           # (hidden, bm) — XLU (idle slot)
    row = jnp.sum(prod_t, axis=0, keepdims=True) + bv_ref[...]  # (1, bm) f32
    val_ref[...] = row.reshape(val_ref.shape)                 # unmasked lane-dense store


def discriminator_forward(img, label, p, *, bm=None, bm_max=1024):
    """p: fused params from prepare_params(). Returns (validity, classifier)."""
    feat, hidden = p["w1"].shape
    class_dim = p["class_dim"]
    cp = p["wc"].shape[1]                  # classifier width padded to 128 lanes
    B = img.shape[0]

    if bm is None:
        # Target ~2 grid steps: engages both TensorCores on v7x ("parallel"
        # batch axis); on single-TC v5e/v6e two steps still keep DMA/compute
        # overlap with minimal (~0.7 us) total step overhead.
        bm = min(bm_max, _round_up(pl.cdiv(_round_up(B, 16), 2), 16))
    # Multiple of 16 (bf16 sublane packing), never larger than padded batch.
    bm = max(16, _round_up(min(bm, _round_up(B, 16)), 16))
    Bp = _round_up(B, bm)
    if Bp != B:
        img = jnp.pad(img, ((0, Bp - B), (0, 0)))
        label = jnp.pad(label, ((0, Bp - B), (0, 0)))
    G = Bp // bm

    # Halve activation HBM traffic; matmul accumulation stays f32 in-kernel.
    img = img.astype(jnp.bfloat16)
    label = label.astype(jnp.bfloat16)

    rows = lambda i: (i, 0)    # batch-tiled operands
    whole = lambda i: (0, 0)   # weights: constant block index -> VMEM-resident

    in_specs = [
        pl.BlockSpec((bm, feat), rows),              # img
        pl.BlockSpec((bm, class_dim), rows),         # label
        pl.BlockSpec((feat, hidden), whole),         # w1
        pl.BlockSpec((1, hidden), whole),            # b1
        pl.BlockSpec((hidden, hidden), whole),       # w2
        pl.BlockSpec((1, hidden), whole),            # b2
        pl.BlockSpec((hidden, cp), whole),           # wc
        pl.BlockSpec((1, cp), whole),                # bc
        pl.BlockSpec((class_dim, hidden), whole),    # wp
        pl.BlockSpec((1, hidden), whole),            # wv_row (valid weight, folded)
        pl.BlockSpec((1, 1), whole),                 # bv
    ]
    out_specs = [
        pl.BlockSpec((bm, cp), rows),                     # classifier
        pl.BlockSpec((1, 1, bm), lambda i: (i, 0, 0)),    # validity, lane-dense rows
    ]
    out_shape = [
        jax.ShapeDtypeStruct((Bp, cp), jnp.float32),
        jax.ShapeDtypeStruct((G, 1, bm), jnp.float32),
    ]

    # VMEM budget: block footprint, double-buffered by the pipeline + headroom.
    block_bytes = (
        bm * feat * 2 + bm * class_dim * 2                # img, label tiles (bf16)
        + feat * hidden * 2 + hidden * 4                  # w1, b1
        + hidden * hidden * 2 + hidden * 4                # w2, b2
        + hidden * cp * 2 + cp * 4                        # wc, bc
        + class_dim * hidden * 2 + hidden * 4 + 4         # wp, wv_row, bv
        + bm * cp * 4 + bm * 4                            # classifier + validity tiles
    )
    # Cap at 56 MiB: leave Mosaic scratch/semaphore headroom on v7x (64 MiB/TC).
    vmem_limit = int(min(max(2 * block_bytes + (8 << 20), 32 << 20), 56 << 20))

    weight_bytes = ((feat + hidden + cp + class_dim) * hidden * 2
                    + (3 * hidden + cp + 1) * 4)
    act_bytes = Bp * (feat + class_dim) * 2 + Bp * (cp + 1) * 4
    flops = 2 * Bp * hidden * (feat + hidden + cp + class_dim) + 4 * Bp * hidden

    cls_out, val_out = pl.pallas_call(
        disc_kernel,
        grid=(G,),
        in_specs=in_specs,
        out_specs=out_specs,
        out_shape=out_shape,
        compiler_params=pltpu.CompilerParams(
            dimension_semantics=("parallel",),
            vmem_limit_bytes=vmem_limit),
        cost_estimate=pl.CostEstimate(
            flops=int(flops), transcendentals=0,
            bytes_accessed=int(weight_bytes + act_bytes)),
    )(img, label, p["w1"], p["b1"], p["w2"], p["b2"],
      p["wc"], p["bc"], p["wp"], p["wv_row"], p["bv"])

    classifier = cls_out[:B, :class_dim]
    validity = val_out.reshape(Bp, 1)[:B]
    return validity, classifier


def init_params(key, feat_dim, class_dim, hidden_dim):
    """PyTorch-like raw f32 params (weights_init: normal(0, 0.02), zero bias).
    Weights stored pre-transposed as (in_dim, out_dim)."""
    ks = jax.random.split(key, 5)
    std = 0.02
    return {
        "w1": jax.random.normal(ks[0], (feat_dim, hidden_dim), jnp.float32) * std,
        "b1": jnp.zeros((1, hidden_dim), jnp.float32),
        "w2": jax.random.normal(ks[1], (hidden_dim, hidden_dim), jnp.float32) * std,
        "b2": jnp.zeros((1, hidden_dim), jnp.float32),
        "wv": jax.random.normal(ks[2], (hidden_dim, 1), jnp.float32) * std,
        "bv": jnp.zeros((1, 1), jnp.float32),
        "wc": jax.random.normal(ks[3], (hidden_dim, class_dim), jnp.float32) * std,
        "bc": jnp.zeros((1, class_dim), jnp.float32),
        "wp": jax.random.normal(ks[4], (class_dim, hidden_dim), jnp.float32) * std,
    }


def prepare_params(raw):
    """Kernel-ready params: classifier head padded to a lane-dense width,
    wv folded out as a (1, hidden) f32 row (added to the projection before the
    reduce), matmul operands cast to bf16, biases kept f32."""
    hidden, class_dim = raw["wc"].shape
    cp = _round_up(class_dim, 128)
    pad = cp - class_dim
    wc, bc = raw["wc"], raw["bc"]
    if pad:
        wc = jnp.concatenate([wc, jnp.zeros((hidden, pad), wc.dtype)], axis=1)
        bc = jnp.concatenate([bc, jnp.zeros((1, pad), bc.dtype)], axis=1)
    return {
        "w1": raw["w1"].astype(jnp.bfloat16),
        "b1": raw["b1"].astype(jnp.float32),
        "w2": raw["w2"].astype(jnp.bfloat16),
        "b2": raw["b2"].astype(jnp.float32),
        "wc": wc.astype(jnp.bfloat16),
        "bc": bc.astype(jnp.float32),
        "wp": raw["wp"].astype(jnp.bfloat16),
        "wv_row": jnp.transpose(raw["wv"]).astype(jnp.float32),   # (1, hidden)
        "bv": raw["bv"].astype(jnp.float32),                      # (1, 1)
        "class_dim": class_dim,
    }


def reference_forward(img, label, raw):
    """Plain-JAX reference mirroring the kernel's bf16-operand / f32-accumulate
    numerics; structure identical to the PyTorch module's forward."""
    bf16, f32 = jnp.bfloat16, jnp.float32
    x = img.astype(bf16)
    lab = label.astype(bf16)
    h = _leaky_relu(jnp.dot(x, raw["w1"].astype(bf16),
                            preferred_element_type=f32) + raw["b1"])
    h = _leaky_relu(jnp.dot(h.astype(bf16), raw["w2"].astype(bf16),
                            preferred_element_type=f32) + raw["b2"])
    var = jnp.dot(lab, raw["wp"].astype(bf16), preferred_element_type=f32)
    validity = (jnp.sum(var * h, axis=1, keepdims=True)
                + jnp.dot(h.astype(bf16), raw["wv"].astype(bf16),
                          preferred_element_type=f32) + raw["bv"])
    classifier = (jnp.dot(h.astype(bf16), raw["wc"].astype(bf16),
                          preferred_element_type=f32) + raw["bc"])
    return validity, classifier


if __name__ == "__main__":
    # Small, lane-aligned shapes consistent with the module's forward.
    B, FEAT, CLASS, HIDDEN = 256, 256, 128, 256

    key = jax.random.PRNGKey(0)
    k_img, k_lab, k_par = jax.random.split(key, 3)

    img = jax.random.normal(k_img, (B, FEAT), jnp.float32)
    label = jax.random.normal(k_lab, (B, CLASS), jnp.float32)
    raw = init_params(k_par, FEAT, CLASS, HIDDEN)
    fused = prepare_params(raw)

    validity, classifier = discriminator_forward(img, label, fused)
    jax.block_until_ready((validity, classifier))

    v_ref, c_ref = reference_forward(img, label, raw)
    assert validity.shape == (B, 1) and classifier.shape == (B, CLASS)
    assert jnp.allclose(validity, v_ref, atol=2e-2, rtol=2e-2)
    assert jnp.allclose(classifier, c_ref, atol=2e-2, rtol=2e-2)

    print("KERNEL_OK")
</pallas_src>

<mosaic_0001>
module attributes {stable_mosaic.version = 11 : i64} {
  func.func @disc_kernel(%arg0: i32, %arg1: memref<128x256xbf16, #tpu.memory_space<vmem>>, %arg2: memref<128x128xbf16, #tpu.memory_space<vmem>>, %arg3: memref<256x256xbf16, #tpu.memory_space<vmem>>, %arg4: memref<1x256xf32, #tpu.memory_space<vmem>>, %arg5: memref<256x256xbf16, #tpu.memory_space<vmem>>, %arg6: memref<1x256xf32, #tpu.memory_space<vmem>>, %arg7: memref<256x128xbf16, #tpu.memory_space<vmem>>, %arg8: memref<1x128xf32, #tpu.memory_space<vmem>>, %arg9: memref<128x256xbf16, #tpu.memory_space<vmem>>, %arg10: memref<1x256xf32, #tpu.memory_space<vmem>>, %arg11: memref<1x1xf32, #tpu.memory_space<vmem>>, %arg12: memref<128x128xf32, #tpu.memory_space<vmem>>, %arg13: memref<1x1x128xf32, #tpu.memory_space<vmem>>) attributes {dimension_semantics = [#tpu.dimension_semantics<parallel>], iteration_bounds = array<i64: 2>, scalar_prefetch = 0 : i64, scratch_operands = 0 : i64, tpu.core_type = #tpu.core_type<tc>, window_params = [{transform_indices = @transform_0, window_bounds = array<i64: 128, 256>}, {transform_indices = @transform_1, window_bounds = array<i64: 128, 128>}, {pipeline_mode = #tpu.pipeline_mode<synchronous>, transform_indices = @transform_2, window_bounds = array<i64: 256, 256>}, {pipeline_mode = #tpu.pipeline_mode<synchronous>, transform_indices = @transform_3, window_bounds = array<i64: 1, 256>}, {pipeline_mode = #tpu.pipeline_mode<synchronous>, transform_indices = @transform_4, window_bounds = array<i64: 256, 256>}, {pipeline_mode = #tpu.pipeline_mode<synchronous>, transform_indices = @transform_5, window_bounds = array<i64: 1, 256>}, {pipeline_mode = #tpu.pipeline_mode<synchronous>, transform_indices = @transform_6, window_bounds = array<i64: 256, 128>}, {pipeline_mode = #tpu.pipeline_mode<synchronous>, transform_indices = @transform_7, window_bounds = array<i64: 1, 128>}, {pipeline_mode = #tpu.pipeline_mode<synchronous>, transform_indices = @transform_8, window_bounds = array<i64: 128, 256>}, {pipeline_mode = #tpu.pipeline_mode<synchronous>, transform_indices = @transform_9, window_bounds = array<i64: 1, 256>}, {pipeline_mode = #tpu.pipeline_mode<synchronous>, transform_indices = @transform_10, window_bounds = array<i64: 1, 1>}, {transform_indices = @transform_11, window_bounds = array<i64: 128, 128>}, {transform_indices = @transform_12, window_bounds = array<i64: 1, 1, 128>}]} {
    %c0 = arith.constant 0 : index
    %c0_0 = arith.constant 0 : index
    %0 = vector.load %arg1[%c0, %c0_0] : memref<128x256xbf16, #tpu.memory_space<vmem>>, vector<128x256xbf16>
    %c0_1 = arith.constant 0 : index
    %c0_2 = arith.constant 0 : index
    %1 = vector.load %arg3[%c0_1, %c0_2] : memref<256x256xbf16, #tpu.memory_space<vmem>>, vector<256x256xbf16>
    %cst = arith.constant dense<0.000000e+00> : vector<128x256xf32>
    %2 = tpu.matmul %0, %1, %cst {dimension_numbers = #tpu.dot_dimension_numbers<[1], [0], [0], [1], [0, 0, 1, 1], [], []>} : vector<128x256xbf16>, vector<256x256xbf16>, vector<128x256xf32> -> vector<128x256xf32>
    %c0_3 = arith.constant 0 : index
    %c0_4 = arith.constant 0 : index
    %3 = vector.load %arg4[%c0_3, %c0_4] : memref<1x256xf32, #tpu.memory_space<vmem>>, vector<1x256xf32>
    %4 = vector.broadcast %3 : vector<1x256xf32> to vector<128x256xf32>
    %5 = arith.addf %2, %4 : vector<128x256xf32>
    %cst_5 = arith.constant 0.000000e+00 : f32
    %6 = vector.broadcast %cst_5 : f32 to vector<128x256xf32>
    %7 = arith.cmpf ogt, %5, %6 : vector<128x256xf32>
    %cst_6 = arith.constant 2.000000e-01 : f32
    %8 = vector.broadcast %cst_6 : f32 to vector<128x256xf32>
    %9 = arith.mulf %8, %5 : vector<128x256xf32>
    %10 = arith.select %7, %5, %9 : vector<128x256xi1>, vector<128x256xf32>
    %11 = arith.truncf %10 : vector<128x256xf32> to vector<128x256xbf16>
    %c0_7 = arith.constant 0 : index
    %c0_8 = arith.constant 0 : index
    %12 = vector.load %arg5[%c0_7, %c0_8] : memref<256x256xbf16, #tpu.memory_space<vmem>>, vector<256x256xbf16>
    %cst_9 = arith.constant dense<0.000000e+00> : vector<128x256xf32>
    %13 = tpu.matmul %11, %12, %cst_9 {dimension_numbers = #tpu.dot_dimension_numbers<[1], [0], [0], [1], [0, 0, 1, 1], [], []>} : vector<128x256xbf16>, vector<256x256xbf16>, vector<128x256xf32> -> vector<128x256xf32>
    %c0_10 = arith.constant 0 : index
    %c0_11 = arith.constant 0 : index
    %14 = vector.load %arg6[%c0_10, %c0_11] : memref<1x256xf32, #tpu.memory_space<vmem>>, vector<1x256xf32>
    %15 = vector.broadcast %14 : vector<1x256xf32> to vector<128x256xf32>
    %16 = arith.addf %13, %15 : vector<128x256xf32>
    %cst_12 = arith.constant 0.000000e+00 : f32
    %17 = vector.broadcast %cst_12 : f32 to vector<128x256xf32>
    %18 = arith.cmpf ogt, %16, %17 : vector<128x256xf32>
    %cst_13 = arith.constant 2.000000e-01 : f32
    %19 = vector.broadcast %cst_13 : f32 to vector<128x256xf32>
    %20 = arith.mulf %19, %16 : vector<128x256xf32>
    %21 = arith.select %18, %16, %20 : vector<128x256xi1>, vector<128x256xf32>
    %22 = arith.truncf %21 : vector<128x256xf32> to vector<128x256xbf16>
    %c0_14 = arith.constant 0 : index
    %c0_15 = arith.constant 0 : index
    %23 = vector.load %arg7[%c0_14, %c0_15] : memref<256x128xbf16, #tpu.memory_space<vmem>>, vector<256x128xbf16>
    %cst_16 = arith.constant dense<0.000000e+00> : vector<128x128xf32>
    %24 = tpu.matmul %22, %23, %cst_16 {dimension_numbers = #tpu.dot_dimension_numbers<[1], [0], [0], [1], [0, 0, 1, 1], [], []>} : vector<128x256xbf16>, vector<256x128xbf16>, vector<128x128xf32> -> vector<128x128xf32>
    %c0_17 = arith.constant 0 : index
    %c0_18 = arith.constant 0 : index
    %25 = vector.load %arg8[%c0_17, %c0_18] : memref<1x128xf32, #tpu.memory_space<vmem>>, vector<1x128xf32>
    %26 = vector.broadcast %25 : vector<1x128xf32> to vector<128x128xf32>
    %27 = arith.addf %24, %26 : vector<128x128xf32>
    %c0_19 = arith.constant 0 : index
    %c0_20 = arith.constant 0 : index
    %28 = vector.load %arg12[%c0_19, %c0_20] : memref<128x128xf32, #tpu.memory_space<vmem>>, vector<128x128xf32>
    tpu.vector_store %arg12[%c0_19, %c0_20], %27 {strides = array<i32>} : memref<128x128xf32, #tpu.memory_space<vmem>>, vector<128x128xf32>,
    %c0_21 = arith.constant 0 : index
    %c0_22 = arith.constant 0 : index
    %29 = vector.load %arg2[%c0_21, %c0_22] : memref<128x128xbf16, #tpu.memory_space<vmem>>, vector<128x128xbf16>
    %c0_23 = arith.constant 0 : index
    %c0_24 = arith.constant 0 : index
    %30 = vector.load %arg9[%c0_23, %c0_24] : memref<128x256xbf16, #tpu.memory_space<vmem>>, vector<128x256xbf16>
    %cst_25 = arith.constant dense<0.000000e+00> : vector<128x256xf32>
    %31 = tpu.matmul %29, %30, %cst_25 {dimension_numbers = #tpu.dot_dimension_numbers<[1], [0], [0], [1], [0, 0, 1, 1], [], []>} : vector<128x128xbf16>, vector<128x256xbf16>, vector<128x256xf32> -> vector<128x256xf32>
    %c0_26 = arith.constant 0 : index
    %c0_27 = arith.constant 0 : index
    %32 = vector.load %arg10[%c0_26, %c0_27] : memref<1x256xf32, #tpu.memory_space<vmem>>, vector<1x256xf32>
    %33 = vector.broadcast %32 : vector<1x256xf32> to vector<128x256xf32>
    %34 = arith.addf %31, %33 : vector<128x256xf32>
    %35 = arith.mulf %34, %21 : vector<128x256xf32>
    %36 = tpu.transpose %35, [1, 0] : vector<128x256xf32> -> vector<256x128xf32>
    %cst_28 = arith.constant dense<0.000000e+00> : vector<128xf32>
    %37 = vector.multi_reduction <add>, %36, %cst_28 [0] : vector<256x128xf32> to vector<128xf32>
    %38 = vector.shape_cast %37 : vector<128xf32> to vector<1x128xf32>
    %c0_29 = arith.constant 0 : index
    %c0_30 = arith.constant 0 : index
    %39 = vector.load %arg11[%c0_29, %c0_30] : memref<1x1xf32, #tpu.memory_space<vmem>>, vector<1x1xf32>
    %40 = vector.broadcast %39 : vector<1x1xf32> to vector<1x128xf32>
    %41 = arith.addf %38, %40 : vector<1x128xf32>
    %42 = vector.shape_cast %41 : vector<1x128xf32> to vector<1x1x128xf32>
    %c0_31 = arith.constant 0 : index
    %c0_32 = arith.constant 0 : index
    %c0_33 = arith.constant 0 : index
    %43 = vector.load %arg13[%c0_31, %c0_32, %c0_33] : memref<1x1x128xf32, #tpu.memory_space<vmem>>, vector<1x1x128xf32>
    tpu.vector_store %arg13[%c0_31, %c0_32, %c0_33], %42 {strides = array<i32>} : memref<1x1x128xf32, #tpu.memory_space<vmem>>, vector<1x1x128xf32>,
    return
  }
  func.func @transform_0(%arg0: i32) -> (i32, i32) {
    %c0_i32 = arith.constant 0 : i32
    %c0_i32_0 = arith.constant 0 : i32
    return %arg0, %c0_i32 : i32, i32
  }
  func.func @transform_1(%arg0: i32) -> (i32, i32) {
    %c0_i32 = arith.constant 0 : i32
    %c0_i32_0 = arith.constant 0 : i32
    return %arg0, %c0_i32 : i32, i32
  }
  func.func @transform_2(%arg0: i32) -> (i32, i32) {
    %c0_i32 = arith.constant 0 : i32
    %c0_i32_0 = arith.constant 0 : i32
    %c0_i32_1 = arith.constant 0 : i32
    return %c0_i32, %c0_i32_0 : i32, i32
  }
  func.func @transform_3(%arg0: i32) -> (i32, i32) {
    %c0_i32 = arith.constant 0 : i32
    %c0_i32_0 = arith.constant 0 : i32
    %c0_i32_1 = arith.constant 0 : i32
    return %c0_i32, %c0_i32_0 : i32, i32
  }
  func.func @transform_4(%arg0: i32) -> (i32, i32) {
    %c0_i32 = arith.constant 0 : i32
    %c0_i32_0 = arith.constant 0 : i32
    %c0_i32_1 = arith.constant 0 : i32
    return %c0_i32, %c0_i32_0 : i32, i32
  }
  func.func @transform_5(%arg0: i32) -> (i32, i32) {
    %c0_i32 = arith.constant 0 : i32
    %c0_i32_0 = arith.constant 0 : i32
    %c0_i32_1 = arith.constant 0 : i32
    return %c0_i32, %c0_i32_0 : i32, i32
  }
  func.func @transform_6(%arg0: i32) -> (i32, i32) {
    %c0_i32 = arith.constant 0 : i32
    %c0_i32_0 = arith.constant 0 : i32
    %c0_i32_1 = arith.constant 0 : i32
    return %c0_i32, %c0_i32_0 : i32, i32
  }
  func.func @transform_7(%arg0: i32) -> (i32, i32) {
    %c0_i32 = arith.constant 0 : i32
    %c0_i32_0 = arith.constant 0 : i32
    %c0_i32_1 = arith.constant 0 : i32
    return %c0_i32, %c0_i32_0 : i32, i32
  }
  func.func @transform_8(%arg0: i32) -> (i32, i32) {
    %c0_i32 = arith.constant 0 : i32
    %c0_i32_0 = arith.constant 0 : i32
    %c0_i32_1 = arith.constant 0 : i32
    return %c0_i32, %c0_i32_0 : i32, i32
  }
  func.func @transform_9(%arg0: i32) -> (i32, i32) {
    %c0_i32 = arith.constant 0 : i32
    %c0_i32_0 = arith.constant 0 : i32
    %c0_i32_1 = arith.constant 0 : i32
    return %c0_i32, %c0_i32_0 : i32, i32
  }
  func.func @transform_10(%arg0: i32) -> (i32, i32) {
    %c0_i32 = arith.constant 0 : i32
    %c0_i32_0 = arith.constant 0 : i32
    %c0_i32_1 = arith.constant 0 : i32
    return %c0_i32, %c0_i32_0 : i32, i32
  }
  func.func @transform_11(%arg0: i32) -> (i32, i32) {
    %c0_i32 = arith.constant 0 : i32
    %c0_i32_0 = arith.constant 0 : i32
    return %arg0, %c0_i32 : i32, i32
  }
  func.func @transform_12(%arg0: i32) -> (i32, i32, i32) {
    %c0_i32 = arith.constant 0 : i32
    %c0_i32_0 = arith.constant 0 : i32
    %c0_i32_1 = arith.constant 0 : i32
    return %arg0, %c0_i32, %c0_i32_0 : i32, i32, i32
  }
}

</mosaic_0001>

<llo_original>
// kernel: tpu_custom_call.1
$region0: #{tpu_custom_call.1}
  #allocation0 [shape = 'u32[]', space=smem, size = 0x4, offset = 0x4, fixed_abs, tag = 'smem constant byte address 0x4 - core index']
  #allocation1 [shape = 'u32[144,128]{1,0:T(1,128)}', space=vmem, size = 0x12000, scoped, tag = 'internal scratch']
  #allocation2 [shape = 'f32[1,1]{1,0:T(1,128)S(1)}', space=vmem, size = 0x200, scoped, tag = 'scoped memory for tpu_custom_call.1']
  %s0 = inlined_call_operand.hbm [shape: bf16[256,256], index: 0, kind: input, shape index: {}]
  %s1 = inlined_call_operand.hbm [shape: bf16[256,128], index: 1, kind: input, shape index: {}]
  %s2 = inlined_call_operand.hbm [shape: bf16[256,256], index: 2, kind: input, shape index: {}]
  %s3 = inlined_call_operand.vmem [shape: f32[1,256], index: 3, kind: input, shape index: {}]
  %s4 = inlined_call_operand.hbm [shape: bf16[256,256], index: 4, kind: input, shape index: {}]
  %s5 = inlined_call_operand.vmem [shape: f32[1,256], index: 5, kind: input, shape index: {}]
  %s6 = inlined_call_operand.hbm [shape: bf16[256,128], index: 6, kind: input, shape index: {}]
  %s7 = inlined_call_operand.vmem [shape: f32[1,128], index: 7, kind: input, shape index: {}]
  %s8 = inlined_call_operand.hbm [shape: bf16[128,256], index: 8, kind: input, shape index: {}]
  %s9 = inlined_call_operand.vmem [shape: f32[1,256], index: 9, kind: input, shape index: {}]
  %s10 = inlined_call_operand.<no memory space> [shape: f32[1,1], index: 10, kind: input, shape index: {}]
  %s11 = inlined_call_operand.hbm [shape: f32[256,128], index: 11, kind: output, shape index: {0}]
  %s12 = inlined_call_operand.hbm [shape: f32[2,1,128], index: 12, kind: output, shape index: {1}]
  %13 = xla_tuple %s11, %s12
  %s14 = sld [smem:[#allocation0]]
  $region109: #{tpu_custom_call.1} parent=0
    _
  %s16 = ssub.s32 1, %s14
  %s17 = scalar_select 0, %s16, %s14
  %v18 = vstv %s10
  %19 = vst [vmem:[#allocation2] sm:$0x1] %v18
  $region1: #{tpu_custom_call.1} parent=0
    #allocation3 [shape = 'u8[131072]{0}', space=vmem, size = 0x20000, scoped, tag = 'input window, operand 0']
    #allocation4 [shape = 's32[2]{0}', space=sflag, size = 0x8, scoped, tag = 'scoped memory for tpu_custom_call.1']
    #allocation5 [shape = 's32[2]{0}', space=sflag, size = 0x8, scoped, tag = 'scoped memory for tpu_custom_call.1']
    #allocation6 [shape = 'u8[65536]{0}', space=vmem, size = 0x10000, scoped, tag = 'input window, operand 1']
    #allocation7 [shape = 's32[2]{0}', space=sflag, size = 0x8, scoped, tag = 'scoped memory for tpu_custom_call.1']
    #allocation8 [shape = 'u8[131072]{0}', space=vmem, size = 0x20000, scoped, tag = 'input window, operand 2, single buffered']
    #allocation9 [shape = 'u8[131072]{0}', space=vmem, size = 0x20000, scoped, tag = 'input window, operand 4, single buffered']
    #allocation10 [shape = 's32[1]{0}', space=sflag, size = 0x4, scoped, tag = 'scoped memory for tpu_custom_call.1']
    #allocation11 [shape = 'u8[65536]{0}', space=vmem, size = 0x10000, scoped, tag = 'input window, operand 6, single buffered']
    #allocation12 [shape = 'u8[65536]{0}', space=vmem, size = 0x10000, scoped, tag = 'input window, operand 8, single buffered']
    #allocation13 [shape = 's32[1]{0}', space=sflag, size = 0x4, scoped, tag = 'scoped memory for tpu_custom_call.1']
    #allocation14 [shape = 'u8[131072]{0}', space=vmem, size = 0x20000, scoped, tag = 'output window, operand 0']
    #allocation15 [shape = 'u8[1024]{0}', space=vmem, size = 0x400, scoped, tag = 'output window, operand 1']
    #allocation16 [shape = 's32[2]{0}', space=sflag, size = 0x8, scoped, tag = 'scoped memory for tpu_custom_call.1']
    %20 = vsyncpa [#allocation4], 0
    %s21 = scalar_lea.sflag [#allocation4], 1
    %22 = vsyncpa %s21, 0
    %23 = vsyncpa [#allocation7], 0
    %s24 = scalar_lea.sflag [#allocation7], 1
    %25 = vsyncpa %s24, 0
    %26 = vsyncpa [#allocation10], 0
    %27 = vsyncpa [#allocation13], 0
    %28 = vsyncpa [#allocation5], 0
    %s29 = scalar_lea.sflag [#allocation5], 1
    %30 = vsyncpa %s29, 0
    %31 = vsyncpa [#allocation16], 0
    %s32 = scalar_lea.sflag [#allocation16], 1
    %33 = vsyncpa %s32, 0
    loop: start=0, step=1, limit=4
    $region2: #{tpu_custom_call.1} parent=1 // loop_pre_header
      _
    $region3: #{tpu_custom_call.1} parent=1 // loop_header
      %s35 = sphi 0, %s39
      %p36 = scmp.ge.s32.totalorder %s35, 4
      %s45 = sphi 0, %s47
      %s48 = sphi 0, %s45
      %s49 = sphi 0, %s48
      %s65 = sphi 0, %s49
      %s71 = sphi 0, %s73
      %s74 = sphi 0, %s71
      %s75 = sphi 0, %s74
      %s91 = sphi 0, %s75
      %s95 = sphi 0, %s95
      %s97 = sphi 0, %s95
      %s98 = sphi 0, %s97
      %s112 = sphi 0, %s98
      %s116 = sphi 0, %s116
      %s118 = sphi 0, %s116
      %s119 = sphi 0, %s118
      %s133 = sphi 0, %s119
      %s137 = sphi 0, %s137
      %s139 = sphi 0, %s137
      %s140 = sphi 0, %s139
      %s154 = sphi 0, %s140
      %s158 = sphi 0, %s158
      %s160 = sphi 0, %s158
      %s161 = sphi 0, %s160
      %s175 = sphi 0, %s161
      %s179 = sphi 0, %s179
      %s181 = sphi 0, %s179
      %s182 = sphi 0, %s181
      %s196 = sphi 0, %s182
      %s200 = sphi 0, %s200
      %s202 = sphi 0, %s200
      %s203 = sphi 0, %s202
      %s217 = sphi 0, %s203
      %s221 = sphi 0, %s221
      %s223 = sphi 0, %s221
      %s224 = sphi 0, %s223
      %s238 = sphi 0, %s224
      %s242 = sphi 0, %s242
      %s244 = sphi 0, %s242
      %s245 = sphi 0, %s244
      %s259 = sphi 0, %s245
      %s263 = sphi 0, %s263
      %s265 = sphi 0, %s263
      %s266 = sphi 0, %s265
      %s280 = sphi 0, %s266
      %s286 = sphi 0, %s288
      %s289 = sphi 0, %s286
      %s290 = sphi 0, %s289
      %s306 = sphi 0, %s290
      %s312 = sphi 0, %s314
      %s315 = sphi 0, %s312
      %s316 = sphi 0, %s315
      %s332 = sphi 0, %s316
    $region4: #{tpu_custom_call.1} parent=1 // loop_header_branch
      %38 = sbr.rel (%p36) target = $region8
    $region5: #{tpu_custom_call.1} parent=1 // loop_body
      %s40 = ssub.s32 %s35, 1
      %s41 = ssub.s32 %s35, 2
      %s42 = sadd.s32 %s35, 1
      %s43 = ssub.s32 %s35, %s42
      %p44 = scmp.eq.s32.totalorder %s43, 0
      %s46 = sadd.s32 %s45, 1
      %s47 = scalar_select %p44, %s45, %s46
      %p50 = pneg %p44
      %p51 = scmp.eq.s32.totalorder %s35, 1
      %p52 = por %p50, %p51
      %p53 = scmp.ne.s32.totalorder %s45, %s48
      %p54 = scmp.eq.s32.totalorder %s35, 0
      %p55 = por %p53, %p54
      %p56 = scmp.ne.s32.totalorder %s45, %s48
      %p57 = scmp.eq.s32.totalorder %s40, 1
      %p58 = por %p56, %p57
      %p59 = scmp.ne.s32.totalorder %s48, %s49
      %p60 = scmp.eq.s32.totalorder %s40, 0
      %p61 = por %p59, %p60
      %p62 = scmp.ne.s32.totalorder %s48, %s49
      %p63 = scmp.eq.s32.totalorder %s41, 1
      %p64 = por %p62, %p63
      %p66 = scmp.ne.s32.totalorder %s49, %s65
      %p67 = scmp.eq.s32.totalorder %s41, 0
      %p68 = por %p66, %p67
      %s69 = ssub.s32 %s35, %s42
      %p70 = scmp.eq.s32.totalorder %s69, 0
      %s72 = sadd.s32 %s71, 1
      %s73 = scalar_select %p70, %s71, %s72
      %p76 = pneg %p70
      %p77 = scmp.eq.s32.totalorder %s35, 1
      %p78 = por %p76, %p77
      %p79 = scmp.ne.s32.totalorder %s71, %s74
      %p80 = scmp.eq.s32.totalorder %s35, 0
      %p81 = por %p79, %p80
      %p82 = scmp.ne.s32.totalorder %s71, %s74
      %p83 = scmp.eq.s32.totalorder %s40, 1
      %p84 = por %p82, %p83
      %p85 = scmp.ne.s32.totalorder %s74, %s75
      %p86 = scmp.eq.s32.totalorder %s40, 0
      %p87 = por %p85, %p86
      %p88 = scmp.ne.s32.totalorder %s74, %s75
      %p89 = scmp.eq.s32.totalorder %s41, 1
      %p90 = por %p88, %p89
      %p92 = scmp.ne.s32.totalorder %s75, %s91
      %p93 = scmp.eq.s32.totalorder %s41, 0
      %p94 = por %p92, %p93
      %s96 = sadd.s32 %s95, 1
      %p99 = scmp.eq.s32.totalorder %s35, 1
      %p100 = scmp.ne.s32.totalorder %s95, %s97
      %p101 = scmp.eq.s32.totalorder %s35, 0
      %p102 = por %p100, %p101
      %p103 = scmp.ne.s32.totalorder %s95, %s97
      %p104 = scmp.eq.s32.totalorder %s40, 1
      %p105 = por %p103, %p104
      %p106 = scmp.ne.s32.totalorder %s97, %s98
      %p107 = scmp.eq.s32.totalorder %s40, 0
      %p108 = por %p106, %p107
      %p109 = scmp.ne.s32.totalorder %s97, %s98
      %p110 = scmp.eq.s32.totalorder %s41, 1
      %p111 = por %p109, %p110
      %p113 = scmp.ne.s32.totalorder %s98, %s112
      %p114 = scmp.eq.s32.totalorder %s41, 0
      %p115 = por %p113, %p114
      %s117 = sadd.s32 %s116, 1
      %p120 = scmp.eq.s32.totalorder %s35, 1
      %p121 = scmp.ne.s32.totalorder %s116, %s118
      %p122 = scmp.eq.s32.totalorder %s35, 0
      %p123 = por %p121, %p122
      %p124 = scmp.ne.s32.totalorder %s116, %s118
      %p125 = scmp.eq.s32.totalorder %s40, 1
      %p126 = por %p124, %p125
      %p127 = scmp.ne.s32.totalorder %s118, %s119
      %p128 = scmp.eq.s32.totalorder %s40, 0
      %p129 = por %p127, %p128
      %p130 = scmp.ne.s32.totalorder %s118, %s119
      %p131 = scmp.eq.s32.totalorder %s41, 1
      %p132 = por %p130, %p131
      %p134 = scmp.ne.s32.totalorder %s119, %s133
      %p135 = scmp.eq.s32.totalorder %s41, 0
      %p136 = por %p134, %p135
      %s138 = sadd.s32 %s137, 1
      %p141 = scmp.eq.s32.totalorder %s35, 1
      %p142 = scmp.ne.s32.totalorder %s137, %s139
      %p143 = scmp.eq.s32.totalorder %s35, 0
      %p144 = por %p142, %p143
      %p145 = scmp.ne.s32.totalorder %s137, %s139
      %p146 = scmp.eq.s32.totalorder %s40, 1
      %p147 = por %p145, %p146
      %p148 = scmp.ne.s32.totalorder %s139, %s140
      %p149 = scmp.eq.s32.totalorder %s40, 0
      %p150 = por %p148, %p149
      %p151 = scmp.ne.s32.totalorder %s139, %s140
      %p152 = scmp.eq.s32.totalorder %s41, 1
      %p153 = por %p151, %p152
      %p155 = scmp.ne.s32.totalorder %s140, %s154
      %p156 = scmp.eq.s32.totalorder %s41, 0
      %p157 = por %p155, %p156
      %s159 = sadd.s32 %s158, 1
      %p162 = scmp.eq.s32.totalorder %s35, 1
      %p163 = scmp.ne.s32.totalorder %s158, %s160
      %p164 = scmp.eq.s32.totalorder %s35, 0
      %p165 = por %p163, %p164
      %p166 = scmp.ne.s32.totalorder %s158, %s160
      %p167 = scmp.eq.s32.totalorder %s40, 1
      %p168 = por %p166, %p167
      %p169 = scmp.ne.s32.totalorder %s160, %s161
      %p170 = scmp.eq.s32.totalorder %s40, 0
      %p171 = por %p169, %p170
      %p172 = scmp.ne.s32.totalorder %s160, %s161
      %p173 = scmp.eq.s32.totalorder %s41, 1
      %p174 = por %p172, %p173
      %p176 = scmp.ne.s32.totalorder %s161, %s175
      %p177 = scmp.eq.s32.totalorder %s41, 0
      %p178 = por %p176, %p177
      %s180 = sadd.s32 %s179, 1
      %p183 = scmp.eq.s32.totalorder %s35, 1
      %p184 = scmp.ne.s32.totalorder %s179, %s181
      %p185 = scmp.eq.s32.totalorder %s35, 0
      %p186 = por %p184, %p185
      %p187 = scmp.ne.s32.totalorder %s179, %s181
      %p188 = scmp.eq.s32.totalorder %s40, 1
      %p189 = por %p187, %p188
      %p190 = scmp.ne.s32.totalorder %s181, %s182
      %p191 = scmp.eq.s32.totalorder %s40, 0
      %p192 = por %p190, %p191
      %p193 = scmp.ne.s32.totalorder %s181, %s182
      %p194 = scmp.eq.s32.totalorder %s41, 1
      %p195 = por %p193, %p194
      %p197 = scmp.ne.s32.totalorder %s182, %s196
      %p198 = scmp.eq.s32.totalorder %s41, 0
      %p199 = por %p197, %p198
      %s201 = sadd.s32 %s200, 1
      %p204 = scmp.eq.s32.totalorder %s35, 1
      %p205 = scmp.ne.s32.totalorder %s200, %s202
      %p206 = scmp.eq.s32.totalorder %s35, 0
      %p207 = por %p205, %p206
      %p208 = scmp.ne.s32.totalorder %s200, %s202
      %p209 = scmp.eq.s32.totalorder %s40, 1
      %p210 = por %p208, %p209
      %p211 = scmp.ne.s32.totalorder %s202, %s203
      %p212 = scmp.eq.s32.totalorder %s40, 0
      %p213 = por %p211, %p212
      %p214 = scmp.ne.s32.totalorder %s202, %s203
      %p215 = scmp.eq.s32.totalorder %s41, 1
      %p216 = por %p214, %p215
      %p218 = scmp.ne.s32.totalorder %s203, %s217
      %p219 = scmp.eq.s32.totalorder %s41, 0
      %p220 = por %p218, %p219
      %s222 = sadd.s32 %s221, 1
      %p225 = scmp.eq.s32.totalorder %s35, 1
      %p226 = scmp.ne.s32.totalorder %s221, %s223
      %p227 = scmp.eq.s32.totalorder %s35, 0
      %p228 = por %p226, %p227
      %p229 = scmp.ne.s32.totalorder %s221, %s223
      %p230 = scmp.eq.s32.totalorder %s40, 1
      %p231 = por %p229, %p230
      %p232 = scmp.ne.s32.totalorder %s223, %s224
      %p233 = scmp.eq.s32.totalorder %s40, 0
      %p234 = por %p232, %p233
      %p235 = scmp.ne.s32.totalorder %s223, %s224
      %p236 = scmp.eq.s32.totalorder %s41, 1
      %p237 = por %p235, %p236
      %p239 = scmp.ne.s32.totalorder %s224, %s238
      %p240 = scmp.eq.s32.totalorder %s41, 0
      %p241 = por %p239, %p240
      %s243 = sadd.s32 %s242, 1
      %p246 = scmp.eq.s32.totalorder %s35, 1
      %p247 = scmp.ne.s32.totalorder %s242, %s244
      %p248 = scmp.eq.s32.totalorder %s35, 0
      %p249 = por %p247, %p248
      %p250 = scmp.ne.s32.totalorder %s242, %s244
      %p251 = scmp.eq.s32.totalorder %s40, 1
      %p252 = por %p250, %p251
      %p253 = scmp.ne.s32.totalorder %s244, %s245
      %p254 = scmp.eq.s32.totalorder %s40, 0
      %p255 = por %p253, %p254
      %p256 = scmp.ne.s32.totalorder %s244, %s245
      %p257 = scmp.eq.s32.totalorder %s41, 1
      %p258 = por %p256, %p257
      %p260 = scmp.ne.s32.totalorder %s245, %s259
      %p261 = scmp.eq.s32.totalorder %s41, 0
      %p262 = por %p260, %p261
      %s264 = sadd.s32 %s263, 1
      %p267 = scmp.eq.s32.totalorder %s35, 1
      %p268 = scmp.ne.s32.totalorder %s263, %s265
      %p269 = scmp.eq.s32.totalorder %s35, 0
      %p270 = por %p268, %p269
      %p271 = scmp.ne.s32.totalorder %s263, %s265
      %p272 = scmp.eq.s32.totalorder %s40, 1
      %p273 = por %p271, %p272
      %p274 = scmp.ne.s32.totalorder %s265, %s266
      %p275 = scmp.eq.s32.totalorder %s40, 0
      %p276 = por %p274, %p275
      %p277 = scmp.ne.s32.totalorder %s265, %s266
      %p278 = scmp.eq.s32.totalorder %s41, 1
      %p279 = por %p277, %p278
      %p281 = scmp.ne.s32.totalorder %s266, %s280
      %p282 = scmp.eq.s32.totalorder %s41, 0
      %p283 = por %p281, %p282
      %s284 = ssub.s32 %s35, %s42
      %p285 = scmp.eq.s32.totalorder %s284, 0
      %s287 = sadd.s32 %s286, 1
      %s288 = scalar_select %p285, %s286, %s287
      %p291 = pneg %p285
      %p292 = scmp.eq.s32.totalorder %s35, 1
      %p293 = por %p291, %p292
      %p294 = scmp.ne.s32.totalorder %s286, %s289
      %p295 = scmp.eq.s32.totalorder %s35, 0
      %p296 = por %p294, %p295
      %p297 = scmp.ne.s32.totalorder %s286, %s289
      %p298 = scmp.eq.s32.totalorder %s40, 1
      %p299 = por %p297, %p298
      %p300 = scmp.ne.s32.totalorder %s289, %s290
      %p301 = scmp.eq.s32.totalorder %s40, 0
      %p302 = por %p300, %p301
      %p303 = scmp.ne.s32.totalorder %s289, %s290
      %p304 = scmp.eq.s32.totalorder %s41, 1
      %p305 = por %p303, %p304
      %p307 = scmp.ne.s32.totalorder %s290, %s306
      %p308 = scmp.eq.s32.totalorder %s41, 0
      %p309 = por %p307, %p308
      %s310 = ssub.s32 %s35, %s42
      %p311 = scmp.eq.s32.totalorder %s310, 0
      %s313 = sadd.s32 %s312, 1
      %s314 = scalar_select %p311, %s312, %s313
      %p317 = pneg %p311
      %p318 = scmp.eq.s32.totalorder %s35, 1
      %p319 = por %p317, %p318
      %p320 = scmp.ne.s32.totalorder %s312, %s315
      %p321 = scmp.eq.s32.totalorder %s35, 0
      %p322 = por %p320, %p321
      %p323 = scmp.ne.s32.totalorder %s312, %s315
      %p324 = scmp.eq.s32.totalorder %s40, 1
      %p325 = por %p323, %p324
      %p326 = scmp.ne.s32.totalorder %s315, %s316
      %p327 = scmp.eq.s32.totalorder %s40, 0
      %p328 = por %p326, %p327
      %p329 = scmp.ne.s32.totalorder %s315, %s316
      %p330 = scmp.eq.s32.totalorder %s41, 1
      %p331 = por %p329, %p330
      %p333 = scmp.ne.s32.totalorder %s316, %s332
      %p334 = scmp.eq.s32.totalorder %s41, 0
      %p335 = por %p333, %p334
      %p336 = scmp.le.s32.totalorder 1, %s35
      %p337 = scmp.lt.s32.totalorder %s35, 3
      %p338 = pnand %p336, %p337
      %p339 = pneg %p338
      // Predicated region
      $region9: #{tpu_custom_call.1} parent=5 // pred_check
        _
      $region10: #{tpu_custom_call.1} parent=5 // pred_check_branch
        %341 = sbr.rel (%p338) target = $region12
      $region11: #{tpu_custom_call.1} parent=5 // pred_region
        %s342 = ssub.s32 %s35, 1
        // Predicated region
        $region13: #{tpu_custom_call.1} parent=11 // pred_check
          %p343 = pneg %p108
        $region14: #{tpu_custom_call.1} parent=11 // pred_check_branch
          %345 = sbr.rel (%p343) target = $region16
        $region15: #{tpu_custom_call.1} parent=11 // pred_region
          %s347 = ssub.s32 4096, 4096
          %348 = vsyncadd [#allocation7], %s347
          %s349 = sshll.u32 [#allocation8], 4
          %s350 = int_to_ptr.vmem [resolvable:$true] %s349
          %355 = dma.hbm_to_vmem [thread:$0]  %s2, 4096, %s350, [#allocation7], 128, 128, 8
        $region16: #{tpu_custom_call.1} parent=11 // pred_fallthru
          _
        // Predicated region
        $region17: #{tpu_custom_call.1} parent=11 // pred_check
          %p356 = pneg %p129
        $region18: #{tpu_custom_call.1} parent=11 // pred_check_branch
          %358 = sbr.rel (%p356) target = $region20
        $region19: #{tpu_custom_call.1} parent=11 // pred_region
          _
        $region20: #{tpu_custom_call.1} parent=11 // pred_fallthru
          _
        // Predicated region
        $region21: #{tpu_custom_call.1} parent=11 // pred_check
          %p359 = pneg %p150
        $region22: #{tpu_custom_call.1} parent=11 // pred_check_branch
          %361 = sbr.rel (%p359) target = $region24
        $region23: #{tpu_custom_call.1} parent=11 // pred_region
          %s363 = ssub.s32 4096, 4096
          %364 = vsyncadd [#allocation10], %s363
          %s365 = sshll.u32 [#allocation9], 4
          %s366 = int_to_ptr.vmem [resolvable:$true] %s365
          %371 = dma.hbm_to_vmem [thread:$0]  %s4, 4096, %s366, [#allocation10], 128, 128, 8
        $region24: #{tpu_custom_call.1} parent=11 // pred_fallthru
          _
        // Predicated region
        $region25: #{tpu_custom_call.1} parent=11 // pred_check
          %p372 = pneg %p171
        $region26: #{tpu_custom_call.1} parent=11 // pred_check_branch
          %374 = sbr.rel (%p372) target = $region28
        $region27: #{tpu_custom_call.1} parent=11 // pred_region
          _
        $region28: #{tpu_custom_call.1} parent=11 // pred_fallthru
          _
        // Predicated region
        $region29: #{tpu_custom_call.1} parent=11 // pred_check
          %p375 = pneg %p192
        $region30: #{tpu_custom_call.1} parent=11 // pred_check_branch
          %377 = sbr.rel (%p375) target = $region32
        $region31: #{tpu_custom_call.1} parent=11 // pred_region
          %s379 = ssub.s32 2048, 2048
          %380 = vsyncadd [#allocation10], %s379
          %s381 = sshll.u32 [#allocation11], 4
          %s382 = int_to_ptr.vmem [resolvable:$true] %s381
          %387 = dma.hbm_to_vmem [thread:$0]  %s6, 2048, %s382, [#allocation10], 64, 64, 4
        $region32: #{tpu_custom_call.1} parent=11 // pred_fallthru
          _
        // Predicated region
        $region33: #{tpu_custom_call.1} parent=11 // pred_check
          %p388 = pneg %p213
        $region34: #{tpu_custom_call.1} parent=11 // pred_check_branch
          %390 = sbr.rel (%p388) target = $region36
        $region35: #{tpu_custom_call.1} parent=11 // pred_region
          _
        $region36: #{tpu_custom_call.1} parent=11 // pred_fallthru
          _
        // Predicated region
        $region37: #{tpu_custom_call.1} parent=11 // pred_check
          %p391 = pneg %p234
        $region38: #{tpu_custom_call.1} parent=11 // pred_check_branch
          %393 = sbr.rel (%p391) target = $region40
        $region39: #{tpu_custom_call.1} parent=11 // pred_region
          %s395 = ssub.s32 2048, 2048
          %396 = vsyncadd [#allocation13], %s395
          %s397 = sshll.u32 [#allocation12], 4
          %s398 = int_to_ptr.vmem [resolvable:$true] %s397
          %403 = dma.hbm_to_vmem [thread:$0]  %s8, 2048, %s398, [#allocation13], 128, 128, 8
        $region40: #{tpu_custom_call.1} parent=11 // pred_fallthru
          _
        // Predicated region
        $region41: #{tpu_custom_call.1} parent=11 // pred_check
          %p404 = pneg %p255
        $region42: #{tpu_custom_call.1} parent=11 // pred_check_branch
          %406 = sbr.rel (%p404) target = $region44
        $region43: #{tpu_custom_call.1} parent=11 // pred_region
          _
        $region44: #{tpu_custom_call.1} parent=11 // pred_fallthru
          _
        // Predicated region
        $region45: #{tpu_custom_call.1} parent=11 // pred_check
          %p407 = pneg %p276
        $region46: #{tpu_custom_call.1} parent=11 // pred_check_branch
          %409 = sbr.rel (%p407) target = $region48
        $region47: #{tpu_custom_call.1} parent=11 // pred_region
          _
        $region48: #{tpu_custom_call.1} parent=11 // pred_fallthru
          _
      $region12: #{tpu_custom_call.1} parent=5 // pred_fallthru
        _
      %p410 = scmp.lt.s32.totalorder %s35, 2
      // Predicated region
      $region49: #{tpu_custom_call.1} parent=5 // pred_check
        %p411 = pneg %p410
      $region50: #{tpu_custom_call.1} parent=5 // pred_check_branch
        %413 = sbr.rel (%p411) target = $region52
      $region51: #{tpu_custom_call.1} parent=5 // pred_region
        // Predicated region
        $region53: #{tpu_custom_call.1} parent=51 // pred_check
          %p414 = pneg %p55
        $region54: #{tpu_custom_call.1} parent=51 // pred_check_branch
          %416 = sbr.rel (%p414) target = $region56
        $region55: #{tpu_custom_call.1} parent=51 // pred_region
          %s417 = sand.u32 %s45, 1
          %s418 = scalar_lea.sflag [#allocation4], %s417
          %s419 = sand.u32 %s45, 1
          %s420 = smul.addr %s419, 128
          %s421 = scalar_lea.vmem [#allocation3], %s420
          %s422 = smul.u32 16, %s35
          %s424 = ssub.s32 2048, 2048
          %425 = vsyncadd %s418, %s424
          %s426 = smul.addr %s422, 2
          %s427 = smul.addr %s426, 64
          %s428 = scalar_lea.hbm %s0, %s427
          %s429 = sshll.u32 %s421, 4
          %s430 = int_to_ptr.vmem [resolvable:$true] %s429
          %435 = dma.hbm_to_vmem [thread:$0]  %s428, 2048, %s430, %s418, 128, 128, 8
        $region56: #{tpu_custom_call.1} parent=51 // pred_fallthru
          _
        // Predicated region
        $region57: #{tpu_custom_call.1} parent=51 // pred_check
          %p436 = pneg %p81
        $region58: #{tpu_custom_call.1} parent=51 // pred_check_branch
          %438 = sbr.rel (%p436) target = $region60
        $region59: #{tpu_custom_call.1} parent=51 // pred_region
          %s439 = sand.u32 %s35, 1
          %s440 = scalar_lea.sflag [#allocation7], %s439
          %s441 = sand.u32 %s71, 1
          %s442 = smul.addr %s441, 64
          %s443 = scalar_lea.vmem [#allocation6], %s442
          %s444 = smul.u32 16, %s35
          %s446 = ssub.s32 1024, 1024
          %447 = vsyncadd %s440, %s446
          %s448 = smul.addr %s444, 64
          %s449 = scalar_lea.hbm %s1, %s448
          %s450 = sshll.u32 %s443, 4
          %s451 = int_to_ptr.vmem [resolvable:$true] %s450
          %456 = dma.hbm_to_vmem [thread:$0]  %s449, 1024, %s451, %s440, 64, 64, 4
        $region60: #{tpu_custom_call.1} parent=51 // pred_fallthru
          _
      $region52: #{tpu_custom_call.1} parent=5 // pred_fallthru
        _
      %p457 = scmp.le.s32.totalorder 1, %s35
      %p458 = scmp.lt.s32.totalorder %s35, 3
      %p459 = pnand %p457, %p458
      %p460 = pneg %p459
      // Predicated region
      $region61: #{tpu_custom_call.1} parent=5 // pred_check
        _
      $region62: #{tpu_custom_call.1} parent=5 // pred_check_branch
        %462 = sbr.rel (%p459) target = $region64
      $region63: #{tpu_custom_call.1} parent=5 // pred_region
        %s463 = ssub.s32 %s35, 1
        %s464 = sand.u32 %s48, 1
        %s465 = scalar_lea.sflag [#allocation4], %s464
        %s466 = sand.u32 %s48, 1
        %s467 = smul.addr %s466, 128
        %s468 = scalar_lea.vmem [#allocation3], %s467
        // Predicated region
        $region65: #{tpu_custom_call.1} parent=63 // pred_check
          %p469 = pneg %p61
        $region66: #{tpu_custom_call.1} parent=63 // pred_check_branch
          %471 = sbr.rel (%p469) target = $region68
        $region67: #{tpu_custom_call.1} parent=63 // pred_region
          %472 = dma.done %s465, 2048
        $region68: #{tpu_custom_call.1} parent=63 // pred_fallthru
          _
        %s473 = sand.u32 %s40, 1
        %s474 = scalar_lea.sflag [#allocation7], %s473
        %s475 = sand.u32 %s74, 1
        %s476 = smul.addr %s475, 64
        %s477 = scalar_lea.vmem [#allocation6], %s476
        // Predicated region
        $region69: #{tpu_custom_call.1} parent=63 // pred_check
          %p478 = pneg %p87
        $region70: #{tpu_custom_call.1} parent=63 // pred_check_branch
          %480 = sbr.rel (%p478) target = $region72
        $region71: #{tpu_custom_call.1} parent=63 // pred_region
          %481 = dma.done %s474, 1024
        $region72: #{tpu_custom_call.1} parent=63 // pred_fallthru
          _
        // Predicated region
        $region73: #{tpu_custom_call.1} parent=63 // pred_check
          %p482 = pneg %p108
        $region74: #{tpu_custom_call.1} parent=63 // pred_check_branch
          %484 = sbr.rel (%p482) target = $region76
        $region75: #{tpu_custom_call.1} parent=63 // pred_region
          %485 = dma.done [#allocation7], 4096
        $region76: #{tpu_custom_call.1} parent=63 // pred_fallthru
          _
        // Predicated region
        $region77: #{tpu_custom_call.1} parent=63 // pred_check
          %p486 = pneg %p150
        $region78: #{tpu_custom_call.1} parent=63 // pred_check_branch
          %488 = sbr.rel (%p486) target = $region80
        $region79: #{tpu_custom_call.1} parent=63 // pred_region
          %489 = dma.done [#allocation10], 4096
        $region80: #{tpu_custom_call.1} parent=63 // pred_fallthru
          _
        // Predicated region
        $region81: #{tpu_custom_call.1} parent=63 // pred_check
          %p490 = pneg %p192
        $region82: #{tpu_custom_call.1} parent=63 // pred_check_branch
          %492 = sbr.rel (%p490) target = $region84
        $region83: #{tpu_custom_call.1} parent=63 // pred_region
          %493 = dma.done [#allocation10], 2048
        $region84: #{tpu_custom_call.1} parent=63 // pred_fallthru
          _
        // Predicated region
        $region85: #{tpu_custom_call.1} parent=63 // pred_check
          %p494 = pneg %p234
        $region86: #{tpu_custom_call.1} parent=63 // pred_check_branch
          %496 = sbr.rel (%p494) target = $region88
        $region87: #{tpu_custom_call.1} parent=63 // pred_region
          %497 = dma.done [#allocation13], 2048
        $region88: #{tpu_custom_call.1} parent=63 // pred_fallthru
          _
        %s498 = sand.u32 %s48, 1
        %s499 = scalar_lea.sflag [#allocation4], %s498
        %s500 = sand.u32 %s48, 1
        %s501 = smul.addr %s500, 128
        %s502 = scalar_lea.vmem [#allocation3], %s501
        %p503 = pneg %p61
        %p504 = pneg %p58
        %s505 = sand.u32 %s40, 1
        %s506 = scalar_lea.sflag [#allocation7], %s505
        %s507 = sand.u32 %s74, 1
        %s508 = smul.addr %s507, 64
        %s509 = scalar_lea.vmem [#allocation6], %s508
        %p510 = pneg %p87
        %p511 = pneg %p84
        %p512 = pneg %p108
        %p513 = pneg %p105
        %p514 = pneg %p129
        %p515 = pneg %p126
        %p516 = pneg %p150
        %p517 = pneg %p147
        %p518 = pneg %p171
        %p519 = pneg %p168
        %p520 = pneg %p192
        %p521 = pneg %p189
        %p522 = pneg %p213
        %p523 = pneg %p210
        %p524 = pneg %p234
        %p525 = pneg %p231
        %p526 = pneg %p255
        %p527 = pneg %p252
        %p528 = pneg %p276
        %p529 = pneg %p273
        %p530 = pneg %p302
        %p531 = pneg %p299
        %s532 = sand.u32 %s289, 1
        %s533 = scalar_lea.sflag [#allocation5], %s532
        %s534 = sand.u32 %s289, 1
        %s535 = smul.addr %s534, 128
        %s536 = scalar_lea.vmem [#allocation14], %s535
        %p537 = pneg %p328
        %p538 = pneg %p325
        %s539 = sand.u32 %s315, 1
        %s540 = scalar_lea.sflag [#allocation16], %s539
        %s541 = sand.u32 %s315, 1
        %s542 = scalar_lea.vmem [#allocation15], %s541
        %s543 = smul.u32 16, %s40
        %s544 = smul.u32 16, %s40
        %s545 = smul.u32 16, %s40
        %v547 = vld [vmem:[%s468] sm:$0xff]
        %v548 = vld [vmem:[%s468 + $0x8] sm:$0xff]
        %v549 = vld [vmem:[%s468 + $0x10] sm:$0xff]
        %v550 = vld [vmem:[%s468 + $0x18] sm:$0xff]
        %v551 = vld [vmem:[%s468 + $0x20] sm:$0xff]
        %v552 = vld [vmem:[%s468 + $0x28] sm:$0xff]
        %v553 = vld [vmem:[%s468 + $0x30] sm:$0xff]
        %v554 = vld [vmem:[%s468 + $0x38] sm:$0xff]
        %v555 = vld [vmem:[%s468 + $0x40] sm:$0xff]
        %v556 = vld [vmem:[%s468 + $0x48] sm:$0xff]
        %v557 = vld [vmem:[%s468 + $0x50] sm:$0xff]
        %v558 = vld [vmem:[%s468 + $0x58] sm:$0xff]
        %v559 = vld [vmem:[%s468 + $0x60] sm:$0xff]
        %v560 = vld [vmem:[%s468 + $0x68] sm:$0xff]
        %v561 = vld [vmem:[%s468 + $0x70] sm:$0xff]
        %v562 = vld [vmem:[%s468 + $0x78] sm:$0xff]
        %v563 = vld [vmem:[#allocation8] sm:$0xff]
        %v564 = vld [vmem:[#allocation8 + $0x8] sm:$0xff]
        %v565 = vld [vmem:[#allocation8 + $0x10] sm:$0xff]
        %v566 = vld [vmem:[#allocation8 + $0x18] sm:$0xff]
        %v567 = vld [vmem:[#allocation8 + $0x20] sm:$0xff]
        %v568 = vld [vmem:[#allocation8 + $0x28] sm:$0xff]
        %v569 = vld [vmem:[#allocation8 + $0x30] sm:$0xff]
        %v570 = vld [vmem:[#allocation8 + $0x38] sm:$0xff]
        %v571 = vld [vmem:[#allocation8 + $0x40] sm:$0xff]
        %v572 = vld [vmem:[#allocation8 + $0x48] sm:$0xff]
        %v573 = vld [vmem:[#allocation8 + $0x50] sm:$0xff]
        %v574 = vld [vmem:[#allocation8 + $0x58] sm:$0xff]
        %v575 = vld [vmem:[#allocation8 + $0x60] sm:$0xff]
        %v576 = vld [vmem:[#allocation8 + $0x68] sm:$0xff]
        %v577 = vld [vmem:[#allocation8 + $0x70] sm:$0xff]
        %v578 = vld [vmem:[#allocation8 + $0x78] sm:$0xff]
        %v579 = vld [vmem:[#allocation8 + $0x80] sm:$0xff]
        %v580 = vld [vmem:[#allocation8 + $0x88] sm:$0xff]
        %v581 = vld [vmem:[#allocation8 + $0x90] sm:$0xff]
        %v582 = vld [vmem:[#allocation8 + $0x98] sm:$0xff]
        %v583 = vld [vmem:[#allocation8 + $0xa0] sm:$0xff]
        %v584 = vld [vmem:[#allocation8 + $0xa8] sm:$0xff]
        %v585 = vld [vmem:[#allocation8 + $0xb0] sm:$0xff]
        %v586 = vld [vmem:[#allocation8 + $0xb8] sm:$0xff]
        %v587 = vld [vmem:[#allocation8 + $0xc0] sm:$0xff]
        %v588 = vld [vmem:[#allocation8 + $0xc8] sm:$0xff]
        %v589 = vld [vmem:[#allocation8 + $0xd0] sm:$0xff]
        %v590 = vld [vmem:[#allocation8 + $0xd8] sm:$0xff]
        %v591 = vld [vmem:[#allocation8 + $0xe0] sm:$0xff]
        %v592 = vld [vmem:[#allocation8 + $0xe8] sm:$0xff]
        %v593 = vld [vmem:[#allocation8 + $0xf0] sm:$0xff]
        %v594 = vld [vmem:[#allocation8 + $0xf8] sm:$0xff]
        %v595 = vld [vmem:[%s3] sm:$0x3]
        %v597 = vlaneseq
        %v598 = vshrl.u32 %v597, 7
        %v599 = vsub.s32 0, %v598
        %v600 = vrot.slane %v595, %v599
        %v601 = vlaneseq
        %v602 = vshrl.u32 %v601, 7
        %v603 = vsub.s32 1, %v602
        %v604 = vrot.slane %v595, %v603
        %v623 = vunpack.c.l.b16 %v547
        %v624 = vunpack.c.h.b16 %v547
        %v625 = vunpack.c.l.b16 %v548
        %v626 = vunpack.c.h.b16 %v548
        %v627 = vunpack.c.l.b16 %v549
        %v628 = vunpack.c.h.b16 %v549
        %v629 = vunpack.c.l.b16 %v550
        %v630 = vunpack.c.h.b16 %v550
        %v631 = vunpack.c.l.b16 %v551
        %v632 = vunpack.c.h.b16 %v551
        %v633 = vunpack.c.l.b16 %v552
        %v634 = vunpack.c.h.b16 %v552
        %v635 = vunpack.c.l.b16 %v553
        %v636 = vunpack.c.h.b16 %v553
        %v637 = vunpack.c.l.b16 %v554
        %v638 = vunpack.c.h.b16 %v554
        %v639 = vunpack.c.l.b16 %v555
        %v640 = vunpack.c.h.b16 %v555
        %v641 = vunpack.c.l.b16 %v556
        %v642 = vunpack.c.h.b16 %v556
        %v643 = vunpack.c.l.b16 %v557
        %v644 = vunpack.c.h.b16 %v557
        %v645 = vunpack.c.l.b16 %v558
        %v646 = vunpack.c.h.b16 %v558
        %v647 = vunpack.c.l.b16 %v559
        %v648 = vunpack.c.h.b16 %v559
        %v649 = vunpack.c.l.b16 %v560
        %v650 = vunpack.c.h.b16 %v560
        %v651 = vunpack.c.l.b16 %v561
        %v652 = vunpack.c.h.b16 %v561
        %v653 = vunpack.c.l.b16 %v562
        %v654 = vunpack.c.h.b16 %v562
        %v655 = vpack.c.b16 %v625, %v623
        %v656 = vpack.c.b16 %v626, %v624
        %v657 = vpack.c.b16 %v629, %v627
        %v658 = vpack.c.b16 %v630, %v628
        %v659 = vpack.c.b16 %v633, %v631
        %v660 = vpack.c.b16 %v634, %v632
        %v661 = vpack.c.b16 %v637, %v635
        %v662 = vpack.c.b16 %v638, %v636
        %v663 = vpack.c.b16 %v641, %v639
        %v664 = vpack.c.b16 %v642, %v640
        %v665 = vpack.c.b16 %v645, %v643
        %v666 = vpack.c.b16 %v646, %v644
        %v667 = vpack.c.b16 %v649, %v647
        %v668 = vpack.c.b16 %v650, %v648
        %v669 = vpack.c.b16 %v653, %v651
        %v670 = vpack.c.b16 %v654, %v652
        %v719 = vunpack.c.l.b16 %v563
        %v720 = vunpack.c.h.b16 %v563
        %v721 = vunpack.c.l.b16 %v564
        %v722 = vunpack.c.h.b16 %v564
        %v723 = vunpack.c.l.b16 %v565
        %v724 = vunpack.c.h.b16 %v565
        %v725 = vunpack.c.l.b16 %v566
        %v726 = vunpack.c.h.b16 %v566
        %v727 = vunpack.c.l.b16 %v567
        %v728 = vunpack.c.h.b16 %v567
        %v729 = vunpack.c.l.b16 %v568
        %v730 = vunpack.c.h.b16 %v568
        %v731 = vunpack.c.l.b16 %v569
        %v732 = vunpack.c.h.b16 %v569
        %v733 = vunpack.c.l.b16 %v570
        %v734 = vunpack.c.h.b16 %v570
        %v735 = vunpack.c.l.b16 %v571
        %v736 = vunpack.c.h.b16 %v571
        %v737 = vunpack.c.l.b16 %v572
        %v738 = vunpack.c.h.b16 %v572
        %v739 = vunpack.c.l.b16 %v573
        %v740 = vunpack.c.h.b16 %v573
        %v741 = vunpack.c.l.b16 %v574
        %v742 = vunpack.c.h.b16 %v574
        %v743 = vunpack.c.l.b16 %v575
        %v744 = vunpack.c.h.b16 %v575
        %v745 = vunpack.c.l.b16 %v576
        %v746 = vunpack.c.h.b16 %v576
        %v747 = vunpack.c.l.b16 %v577
        %v748 = vunpack.c.h.b16 %v577
        %v749 = vunpack.c.l.b16 %v578
        %v750 = vunpack.c.h.b16 %v578
        %v751 = vunpack.c.l.b16 %v579
        %v752 = vunpack.c.h.b16 %v579
        %v753 = vunpack.c.l.b16 %v580
        %v754 = vunpack.c.h.b16 %v580
        %v755 = vunpack.c.l.b16 %v581
        %v756 = vunpack.c.h.b16 %v581
        %v757 = vunpack.c.l.b16 %v582
        %v758 = vunpack.c.h.b16 %v582
        %v759 = vunpack.c.l.b16 %v583
        %v760 = vunpack.c.h.b16 %v583
        %v761 = vunpack.c.l.b16 %v584
        %v762 = vunpack.c.h.b16 %v584
        %v763 = vunpack.c.l.b16 %v585
        %v764 = vunpack.c.h.b16 %v585
        %v765 = vunpack.c.l.b16 %v586
        %v766 = vunpack.c.h.b16 %v586
        %v767 = vunpack.c.l.b16 %v587
        %v768 = vunpack.c.h.b16 %v587
        %v769 = vunpack.c.l.b16 %v588
        %v770 = vunpack.c.h.b16 %v588
        %v771 = vunpack.c.l.b16 %v589
        %v772 = vunpack.c.h.b16 %v589
        %v773 = vunpack.c.l.b16 %v590
        %v774 = vunpack.c.h.b16 %v590
        %v775 = vunpack.c.l.b16 %v591
        %v776 = vunpack.c.h.b16 %v591
        %v777 = vunpack.c.l.b16 %v592
        %v778 = vunpack.c.h.b16 %v592
        %v779 = vunpack.c.l.b16 %v593
        %v780 = vunpack.c.h.b16 %v593
        %v781 = vunpack.c.l.b16 %v594
        %v782 = vunpack.c.h.b16 %v594
        %v783 = vpack.c.b16 %v721, %v719
        %v784 = vpack.c.b16 %v722, %v720
        %v785 = vpack.c.b16 %v725, %v723
        %v786 = vpack.c.b16 %v726, %v724
        %v787 = vpack.c.b16 %v729, %v727
        %v788 = vpack.c.b16 %v730, %v728
        %v789 = vpack.c.b16 %v733, %v731
        %v790 = vpack.c.b16 %v734, %v732
        %v791 = vpack.c.b16 %v737, %v735
        %v792 = vpack.c.b16 %v738, %v736
        %v793 = vpack.c.b16 %v741, %v739
        %v794 = vpack.c.b16 %v742, %v740
        %v795 = vpack.c.b16 %v745, %v743
        %v796 = vpack.c.b16 %v746, %v744
        %v797 = vpack.c.b16 %v749, %v747
        %v798 = vpack.c.b16 %v750, %v748
        %v799 = vpack.c.b16 %v753, %v751
        %v800 = vpack.c.b16 %v754, %v752
        %v801 = vpack.c.b16 %v757, %v755
        %v802 = vpack.c.b16 %v758, %v756
        %v803 = vpack.c.b16 %v761, %v759
        %v804 = vpack.c.b16 %v762, %v760
        %v805 = vpack.c.b16 %v765, %v763
        %v806 = vpack.c.b16 %v766, %v764
        %v807 = vpack.c.b16 %v769, %v767
        %v808 = vpack.c.b16 %v770, %v768
        %v809 = vpack.c.b16 %v773, %v771
        %v810 = vpack.c.b16 %v774, %v772
        %v811 = vpack.c.b16 %v777, %v775
        %v812 = vpack.c.b16 %v778, %v776
        %v813 = vpack.c.b16 %v781, %v779
        %v814 = vpack.c.b16 %v782, %v780
        %847 = vmatprep.subr.bf16.mxu0 %v784
        %848 = vmatpush1.bf16.msra.mxu0 %v783
        %849 = vmatprep.subr.bf16.mxu0 %v786
        %850 = vmatpush1.bf16.msra.mxu0 %v785
        %851 = vmatprep.subr.bf16.mxu0 %v788
        %852 = vmatpush1.bf16.msra.mxu0 %v787
        %853 = vmatprep.subr.bf16.mxu0 %v790
        %854 = vmatpush1.bf16.msra.mxu0 %v789
        %855 = vmatprep.subr.bf16.mxu0 %v792
        %856 = vmatpush1.bf16.msra.mxu0 %v791
        %857 = vmatprep.subr.bf16.mxu0 %v794
        %858 = vmatpush1.bf16.msra.mxu0 %v793
        %859 = vmatprep.subr.bf16.mxu0 %v796
        %860 = vmatpush1.bf16.msra.mxu0 %v795
        %861 = vmatprep.subr.bf16.mxu0 %v798
        %862 = vmatpush1.bf16.msra.mxu0 %v797
        %863 = vmatprep.subr.bf16.mxu0 %v800
        %864 = vmatpush1.bf16.msra.mxu0 %v799
        %865 = vmatprep.subr.bf16.mxu0 %v802
        %866 = vmatpush1.bf16.msra.mxu0 %v801
        %867 = vmatprep.subr.bf16.mxu0 %v804
        %868 = vmatpush1.bf16.msra.mxu0 %v803
        %869 = vmatprep.subr.bf16.mxu0 %v806
        %870 = vmatpush1.bf16.msra.mxu0 %v805
        %871 = vmatprep.subr.bf16.mxu0 %v808
        %872 = vmatpush1.bf16.msra.mxu0 %v807
        %873 = vmatprep.subr.bf16.mxu0 %v810
        %874 = vmatpush1.bf16.msra.mxu0 %v809
        %875 = vmatprep.subr.bf16.mxu0 %v812
        %876 = vmatpush1.bf16.msra.mxu0 %v811
        %877 = vmatprep.subr.bf16.mxu0 %v814
        %878 = vmatpush1.bf16.msra.mxu0 %v813
        %879 = vmatprep.mubr.bf16.mxu0 %v656
        %880 = vmatmul.mubr.bf16.gmra.mrb[0].mxu0 %v655
        %v881 = vpop.f32.mrb[0].mxu0
        %v882 = vadd.f32 %v600, %v881
        %v883 = vpop.f32.mrb[0].mxu0
        %v884 = vadd.f32 %v604, %v883
        %v885 = vpop.f32.mrb[0].mxu0
        %v886 = vadd.f32 %v600, %v885
        %v887 = vpop.f32.mrb[0].mxu0
        %v888 = vadd.f32 %v604, %v887
        %889 = vmatprep.mubr.bf16.mxu0 %v658
        %890 = vmatmul.mubr.bf16.gmra.mrb[0].mxu0 %v657
        %v891 = vpop.f32.mrb[0].mxu0
        %v892 = vadd.f32 %v600, %v891
        %v893 = vpop.f32.mrb[0].mxu0
        %v894 = vadd.f32 %v604, %v893
        %v895 = vpop.f32.mrb[0].mxu0
        %v896 = vadd.f32 %v600, %v895
        %v897 = vpop.f32.mrb[0].mxu0
        %v898 = vadd.f32 %v604, %v897
        %899 = vmatprep.mubr.bf16.mxu0 %v660
        %900 = vmatmul.mubr.bf16.gmra.mrb[0].mxu0 %v659
        %v901 = vpop.f32.mrb[0].mxu0
        %v902 = vadd.f32 %v600, %v901
        %v903 = vpop.f32.mrb[0].mxu0
        %v904 = vadd.f32 %v604, %v903
        %v905 = vpop.f32.mrb[0].mxu0
        %v906 = vadd.f32 %v600, %v905
        %v907 = vpop.f32.mrb[0].mxu0
        %v908 = vadd.f32 %v604, %v907
        %909 = vmatprep.mubr.bf16.mxu0 %v662
        %910 = vmatmul.mubr.bf16.gmra.mrb[0].mxu0 %v661
        %v911 = vpop.f32.mrb[0].mxu0
        %v912 = vadd.f32 %v600, %v911
        %v913 = vpop.f32.mrb[0].mxu0
        %v914 = vadd.f32 %v604, %v913
        %v915 = vpop.f32.mrb[0].mxu0
        %v916 = vadd.f32 %v600, %v915
        %v917 = vpop.f32.mrb[0].mxu0
        %v918 = vadd.f32 %v604, %v917
        %919 = vmatprep.mubr.bf16.mxu0 %v664
        %920 = vmatmul.mubr.bf16.gmra.mrb[0].mxu0 %v663
        %v921 = vpop.f32.mrb[0].mxu0
        %v922 = vadd.f32 %v600, %v921
        %v923 = vpop.f32.mrb[0].mxu0
        %v924 = vadd.f32 %v604, %v923
        %v925 = vpop.f32.mrb[0].mxu0
        %v926 = vadd.f32 %v600, %v925
        %v927 = vpop.f32.mrb[0].mxu0
        %v928 = vadd.f32 %v604, %v927
        %929 = vmatprep.mubr.bf16.mxu0 %v666
        %930 = vmatmul.mubr.bf16.gmra.mrb[0].mxu0 %v665
        %v931 = vpop.f32.mrb[0].mxu0
        %v932 = vadd.f32 %v600, %v931
        %v933 = vpop.f32.mrb[0].mxu0
        %v934 = vadd.f32 %v604, %v933
        %v935 = vpop.f32.mrb[0].mxu0
        %v936 = vadd.f32 %v600, %v935
        %v937 = vpop.f32.mrb[0].mxu0
        %v938 = vadd.f32 %v604, %v937
        %939 = vmatprep.mubr.bf16.mxu0 %v668
        %940 = vmatmul.mubr.bf16.gmra.mrb[0].mxu0 %v667
        %v941 = vpop.f32.mrb[0].mxu0
        %v942 = vadd.f32 %v600, %v941
        %v943 = vpop.f32.mrb[0].mxu0
        %v944 = vadd.f32 %v604, %v943
        %v945 = vpop.f32.mrb[0].mxu0
        %v946 = vadd.f32 %v600, %v945
        %v947 = vpop.f32.mrb[0].mxu0
        %v948 = vadd.f32 %v604, %v947
        %949 = vmatprep.mubr.bf16.mxu0 %v670
        %950 = vmatmul.mubr.bf16.gmra.mrb[0].mxu0 %v669
        %v951 = vpop.f32.mrb[0].mxu0
        %v952 = vadd.f32 %v600, %v951
        %v953 = vpop.f32.mrb[0].mxu0
        %v954 = vadd.f32 %v604, %v953
        %v955 = vpop.f32.mrb[0].mxu0
        %v956 = vadd.f32 %v600, %v955
        %v957 = vpop.f32.mrb[0].mxu0
        %v958 = vadd.f32 %v604, %v957
        %959 = vdwg.mxu0
        %vm960 = vcmp.gt.f32.partialorder %v882, 0.0
        %vm961 = vcmp.gt.f32.partialorder %v884, 0.0
        %vm962 = vcmp.gt.f32.partialorder %v886, 0.0
        %vm963 = vcmp.gt.f32.partialorder %v888, 0.0
        %vm964 = vcmp.gt.f32.partialorder %v892, 0.0
        %vm965 = vcmp.gt.f32.partialorder %v894, 0.0
        %vm966 = vcmp.gt.f32.partialorder %v896, 0.0
        %vm967 = vcmp.gt.f32.partialorder %v898, 0.0
        %vm968 = vcmp.gt.f32.partialorder %v902, 0.0
        %vm969 = vcmp.gt.f32.partialorder %v904, 0.0
        %vm970 = vcmp.gt.f32.partialorder %v906, 0.0
        %vm971 = vcmp.gt.f32.partialorder %v908, 0.0
        %vm972 = vcmp.gt.f32.partialorder %v912, 0.0
        %vm973 = vcmp.gt.f32.partialorder %v914, 0.0
        %vm974 = vcmp.gt.f32.partialorder %v916, 0.0
        %vm975 = vcmp.gt.f32.partialorder %v918, 0.0
        %vm976 = vcmp.gt.f32.partialorder %v922, 0.0
        %vm977 = vcmp.gt.f32.partialorder %v924, 0.0
        %vm978 = vcmp.gt.f32.partialorder %v926, 0.0
        %vm979 = vcmp.gt.f32.partialorder %v928, 0.0
        %vm980 = vcmp.gt.f32.partialorder %v932, 0.0
        %vm981 = vcmp.gt.f32.partialorder %v934, 0.0
        %vm982 = vcmp.gt.f32.partialorder %v936, 0.0
        %vm983 = vcmp.gt.f32.partialorder %v938, 0.0
        %vm984 = vcmp.gt.f32.partialorder %v942, 0.0
        %vm985 = vcmp.gt.f32.partialorder %v944, 0.0
        %vm986 = vcmp.gt.f32.partialorder %v946, 0.0
        %vm987 = vcmp.gt.f32.partialorder %v948, 0.0
        %vm988 = vcmp.gt.f32.partialorder %v952, 0.0
        %vm989 = vcmp.gt.f32.partialorder %v954, 0.0
        %vm990 = vcmp.gt.f32.partialorder %v956, 0.0
        %vm991 = vcmp.gt.f32.partialorder %v958, 0.0
        %v992 = vmul.f32 %v882, 0.2
        %v993 = vmul.f32 %v884, 0.2
        %v994 = vmul.f32 %v886, 0.2
        %v995 = vmul.f32 %v888, 0.2
        %v996 = vmul.f32 %v892, 0.2
        %v997 = vmul.f32 %v894, 0.2
        %v998 = vmul.f32 %v896, 0.2
        %v999 = vmul.f32 %v898, 0.2
        %v1000 = vmul.f32 %v902, 0.2
        %v1001 = vmul.f32 %v904, 0.2
        %v1002 = vmul.f32 %v906, 0.2
        %v1003 = vmul.f32 %v908, 0.2
        %v1004 = vmul.f32 %v912, 0.2
        %v1005 = vmul.f32 %v914, 0.2
        %v1006 = vmul.f32 %v916, 0.2
        %v1007 = vmul.f32 %v918, 0.2
        %v1008 = vmul.f32 %v922, 0.2
        %v1009 = vmul.f32 %v924, 0.2
        %v1010 = vmul.f32 %v926, 0.2
        %v1011 = vmul.f32 %v928, 0.2
        %v1012 = vmul.f32 %v932, 0.2
        %v1013 = vmul.f32 %v934, 0.2
        %v1014 = vmul.f32 %v936, 0.2
        %v1015 = vmul.f32 %v938, 0.2
        %v1016 = vmul.f32 %v942, 0.2
        %v1017 = vmul.f32 %v944, 0.2
        %v1018 = vmul.f32 %v946, 0.2
        %v1019 = vmul.f32 %v948, 0.2
        %v1020 = vmul.f32 %v952, 0.2
        %v1021 = vmul.f32 %v954, 0.2
        %v1022 = vmul.f32 %v956, 0.2
        %v1023 = vmul.f32 %v958, 0.2
        %v1024 = vsel %vm960, %v882, %v992
        %v1025 = vsel %vm961, %v884, %v993
        %v1026 = vsel %vm962, %v886, %v994
        %v1027 = vsel %vm963, %v888, %v995
        %v1028 = vsel %vm964, %v892, %v996
        %v1029 = vsel %vm965, %v894, %v997
        %v1030 = vsel %vm966, %v896, %v998
        %v1031 = vsel %vm967, %v898, %v999
        %v1032 = vsel %vm968, %v902, %v1000
        %v1033 = vsel %vm969, %v904, %v1001
        %v1034 = vsel %vm970, %v906, %v1002
        %v1035 = vsel %vm971, %v908, %v1003
        %v1036 = vsel %vm972, %v912, %v1004
        %v1037 = vsel %vm973, %v914, %v1005
        %v1038 = vsel %vm974, %v916, %v1006
        %v1039 = vsel %vm975, %v918, %v1007
        %v1040 = vsel %vm976, %v922, %v1008
        %v1041 = vsel %vm977, %v924, %v1009
        %v1042 = vsel %vm978, %v926, %v1010
        %v1043 = vsel %vm979, %v928, %v1011
        %v1044 = vsel %vm980, %v932, %v1012
        %v1045 = vsel %vm981, %v934, %v1013
        %v1046 = vsel %vm982, %v936, %v1014
        %v1047 = vsel %vm983, %v938, %v1015
        %v1048 = vsel %vm984, %v942, %v1016
        %v1049 = vsel %vm985, %v944, %v1017
        %v1050 = vsel %vm986, %v946, %v1018
        %v1051 = vsel %vm987, %v948, %v1019
        %v1052 = vsel %vm988, %v952, %v1020
        %v1053 = vsel %vm989, %v954, %v1021
        %v1054 = vsel %vm990, %v956, %v1022
        %v1055 = vsel %vm991, %v958, %v1023
        %v1056 = vpack.c.bf16 %v1026, %v1024
        %v1057 = vpack.c.bf16 %v1027, %v1025
        %v1058 = vpack.c.bf16 %v1030, %v1028
        %v1059 = vpack.c.bf16 %v1031, %v1029
        %v1060 = vpack.c.bf16 %v1034, %v1032
        %v1061 = vpack.c.bf16 %v1035, %v1033
        %v1062 = vpack.c.bf16 %v1038, %v1036
        %v1063 = vpack.c.bf16 %v1039, %v1037
        %v1064 = vpack.c.bf16 %v1042, %v1040
        %v1065 = vpack.c.bf16 %v1043, %v1041
        %v1066 = vpack.c.bf16 %v1046, %v1044
        %v1067 = vpack.c.bf16 %v1047, %v1045
        %v1068 = vpack.c.bf16 %v1050, %v1048
        %v1069 = vpack.c.bf16 %v1051, %v1049
        %v1070 = vpack.c.bf16 %v1054, %v1052
        %v1071 = vpack.c.bf16 %v1055, %v1053
        %v1072 = vld [vmem:[#allocation9] sm:$0xff]
        %v1073 = vld [vmem:[#allocation9 + $0x8] sm:$0xff]
        %v1074 = vld [vmem:[#allocation9 + $0x10] sm:$0xff]
        %v1075 = vld [vmem:[#allocation9 + $0x18] sm:$0xff]
        %v1076 = vld [vmem:[#allocation9 + $0x20] sm:$0xff]
        %v1077 = vld [vmem:[#allocation9 + $0x28] sm:$0xff]
        %v1078 = vld [vmem:[#allocation9 + $0x30] sm:$0xff]
        %v1079 = vld [vmem:[#allocation9 + $0x38] sm:$0xff]
        %v1080 = vld [vmem:[#allocation9 + $0x40] sm:$0xff]
        %v1081 = vld [vmem:[#allocation9 + $0x48] sm:$0xff]
        %v1082 = vld [vmem:[#allocation9 + $0x50] sm:$0xff]
        %v1083 = vld [vmem:[#allocation9 + $0x58] sm:$0xff]
        %v1084 = vld [vmem:[#allocation9 + $0x60] sm:$0xff]
        %v1085 = vld [vmem:[#allocation9 + $0x68] sm:$0xff]
        %v1086 = vld [vmem:[#allocation9 + $0x70] sm:$0xff]
        %v1087 = vld [vmem:[#allocation9 + $0x78] sm:$0xff]
        %v1088 = vld [vmem:[#allocation9 + $0x80] sm:$0xff]
        %v1089 = vld [vmem:[#allocation9 + $0x88] sm:$0xff]
        %v1090 = vld [vmem:[#allocation9 + $0x90] sm:$0xff]
        %v1091 = vld [vmem:[#allocation9 + $0x98] sm:$0xff]
        %v1092 = vld [vmem:[#allocation9 + $0xa0] sm:$0xff]
        %v1093 = vld [vmem:[#allocation9 + $0xa8] sm:$0xff]
        %v1094 = vld [vmem:[#allocation9 + $0xb0] sm:$0xff]
        %v1095 = vld [vmem:[#allocation9 + $0xb8] sm:$0xff]
        %v1096 = vld [vmem:[#allocation9 + $0xc0] sm:$0xff]
        %v1097 = vld [vmem:[#allocation9 + $0xc8] sm:$0xff]
        %v1098 = vld [vmem:[#allocation9 + $0xd0] sm:$0xff]
        %v1099 = vld [vmem:[#allocation9 + $0xd8] sm:$0xff]
        %v1100 = vld [vmem:[#allocation9 + $0xe0] sm:$0xff]
        %v1101 = vld [vmem:[#allocation9 + $0xe8] sm:$0xff]
        %v1102 = vld [vmem:[#allocation9 + $0xf0] sm:$0xff]
        %v1103 = vld [vmem:[#allocation9 + $0xf8] sm:$0xff]
        %v1104 = vld [vmem:[%s5] sm:$0x3]
        %v1106 = vlaneseq
        %v1107 = vshrl.u32 %v1106, 7
        %v1108 = vsub.s32 0, %v1107
        %v1109 = vrot.slane %v1104, %v1108
        %v1110 = vlaneseq
        %v1111 = vshrl.u32 %v1110, 7
        %v1112 = vsub.s32 1, %v1111
        %v1113 = vrot.slane %v1104, %v1112
        %v1148 = vunpack.c.l.b16 %v1072
        %v1149 = vunpack.c.h.b16 %v1072
        %v1150 = vunpack.c.l.b16 %v1073
        %v1151 = vunpack.c.h.b16 %v1073
        %v1152 = vunpack.c.l.b16 %v1074
        %v1153 = vunpack.c.h.b16 %v1074
        %v1154 = vunpack.c.l.b16 %v1075
        %v1155 = vunpack.c.h.b16 %v1075
        %v1156 = vunpack.c.l.b16 %v1076
        %v1157 = vunpack.c.h.b16 %v1076
        %v1158 = vunpack.c.l.b16 %v1077
        %v1159 = vunpack.c.h.b16 %v1077
        %v1160 = vunpack.c.l.b16 %v1078
        %v1161 = vunpack.c.h.b16 %v1078
        %v1162 = vunpack.c.l.b16 %v1079
        %v1163 = vunpack.c.h.b16 %v1079
        %v1164 = vunpack.c.l.b16 %v1080
        %v1165 = vunpack.c.h.b16 %v1080
        %v1166 = vunpack.c.l.b16 %v1081
        %v1167 = vunpack.c.h.b16 %v1081
        %v1168 = vunpack.c.l.b16 %v1082
        %v1169 = vunpack.c.h.b16 %v1082
        %v1170 = vunpack.c.l.b16 %v1083
        %v1171 = vunpack.c.h.b16 %v1083
        %v1172 = vunpack.c.l.b16 %v1084
        %v1173 = vunpack.c.h.b16 %v1084
        %v1174 = vunpack.c.l.b16 %v1085
        %v1175 = vunpack.c.h.b16 %v1085
        %v1176 = vunpack.c.l.b16 %v1086
        %v1177 = vunpack.c.h.b16 %v1086
        %v1178 = vunpack.c.l.b16 %v1087
        %v1179 = vunpack.c.h.b16 %v1087
        %v1180 = vunpack.c.l.b16 %v1088
        %v1181 = vunpack.c.h.b16 %v1088
        %v1182 = vunpack.c.l.b16 %v1089
        %v1183 = vunpack.c.h.b16 %v1089
        %v1184 = vunpack.c.l.b16 %v1090
        %v1185 = vunpack.c.h.b16 %v1090
        %v1186 = vunpack.c.l.b16 %v1091
        %v1187 = vunpack.c.h.b16 %v1091
        %v1188 = vunpack.c.l.b16 %v1092
        %v1189 = vunpack.c.h.b16 %v1092
        %v1190 = vunpack.c.l.b16 %v1093
        %v1191 = vunpack.c.h.b16 %v1093
        %v1192 = vunpack.c.l.b16 %v1094
        %v1193 = vunpack.c.h.b16 %v1094
        %v1194 = vunpack.c.l.b16 %v1095
        %v1195 = vunpack.c.h.b16 %v1095
        %v1196 = vunpack.c.l.b16 %v1096
        %v1197 = vunpack.c.h.b16 %v1096
        %v1198 = vunpack.c.l.b16 %v1097
        %v1199 = vunpack.c.h.b16 %v1097
        %v1200 = vunpack.c.l.b16 %v1098
        %v1201 = vunpack.c.h.b16 %v1098
        %v1202 = vunpack.c.l.b16 %v1099
        %v1203 = vunpack.c.h.b16 %v1099
        %v1204 = vunpack.c.l.b16 %v1100
        %v1205 = vunpack.c.h.b16 %v1100
        %v1206 = vunpack.c.l.b16 %v1101
        %v1207 = vunpack.c.h.b16 %v1101
        %v1208 = vunpack.c.l.b16 %v1102
        %v1209 = vunpack.c.h.b16 %v1102
        %v1210 = vunpack.c.l.b16 %v1103
        %v1211 = vunpack.c.h.b16 %v1103
        %v1212 = vpack.c.b16 %v1150, %v1148
        %v1213 = vpack.c.b16 %v1151, %v1149
        %v1214 = vpack.c.b16 %v1154, %v1152
        %v1215 = vpack.c.b16 %v1155, %v1153
        %v1216 = vpack.c.b16 %v1158, %v1156
        %v1217 = vpack.c.b16 %v1159, %v1157
        %v1218 = vpack.c.b16 %v1162, %v1160
        %v1219 = vpack.c.b16 %v1163, %v1161
        %v1220 = vpack.c.b16 %v1166, %v1164
        %v1221 = vpack.c.b16 %v1167, %v1165
        %v1222 = vpack.c.b16 %v1170, %v1168
        %v1223 = vpack.c.b16 %v1171, %v1169
        %v1224 = vpack.c.b16 %v1174, %v1172
        %v1225 = vpack.c.b16 %v1175, %v1173
        %v1226 = vpack.c.b16 %v1178, %v1176
        %v1227 = vpack.c.b16 %v1179, %v1177
        %v1228 = vpack.c.b16 %v1182, %v1180
        %v1229 = vpack.c.b16 %v1183, %v1181
        %v1230 = vpack.c.b16 %v1186, %v1184
        %v1231 = vpack.c.b16 %v1187, %v1185
        %v1232 = vpack.c.b16 %v1190, %v1188
        %v1233 = vpack.c.b16 %v1191, %v1189
        %v1234 = vpack.c.b16 %v1194, %v1192
        %v1235 = vpack.c.b16 %v1195, %v1193
        %v1236 = vpack.c.b16 %v1198, %v1196
        %v1237 = vpack.c.b16 %v1199, %v1197
        %v1238 = vpack.c.b16 %v1202, %v1200
        %v1239 = vpack.c.b16 %v1203, %v1201
        %v1240 = vpack.c.b16 %v1206, %v1204
        %v1241 = vpack.c.b16 %v1207, %v1205
        %v1242 = vpack.c.b16 %v1210, %v1208
        %v1243 = vpack.c.b16 %v1211, %v1209
        %1276 = vmatprep.subr.bf16.mxu0 %v1213
        %1277 = vmatpush1.bf16.msra.mxu0 %v1212
        %1278 = vmatprep.subr.bf16.mxu0 %v1215
        %1279 = vmatpush1.bf16.msra.mxu0 %v1214
        %1280 = vmatprep.subr.bf16.mxu0 %v1217
        %1281 = vmatpush1.bf16.msra.mxu0 %v1216
        %1282 = vmatprep.subr.bf16.mxu0 %v1219
        %1283 = vmatpush1.bf16.msra.mxu0 %v1218
        %1284 = vmatprep.subr.bf16.mxu0 %v1221
        %1285 = vmatpush1.bf16.msra.mxu0 %v1220
        %1286 = vmatprep.subr.bf16.mxu0 %v1223
        %1287 = vmatpush1.bf16.msra.mxu0 %v1222
        %1288 = vmatprep.subr.bf16.mxu0 %v1225
        %1289 = vmatpush1.bf16.msra.mxu0 %v1224
        %1290 = vmatprep.subr.bf16.mxu0 %v1227
        %1291 = vmatpush1.bf16.msra.mxu0 %v1226
        %1292 = vmatprep.subr.bf16.mxu0 %v1229
        %1293 = vmatpush1.bf16.msra.mxu0 %v1228
        %1294 = vmatprep.subr.bf16.mxu0 %v1231
        %1295 = vmatpush1.bf16.msra.mxu0 %v1230
        %1296 = vmatprep.subr.bf16.mxu0 %v1233
        %1297 = vmatpush1.bf16.msra.mxu0 %v1232
        %1298 = vmatprep.subr.bf16.mxu0 %v1235
        %1299 = vmatpush1.bf16.msra.mxu0 %v1234
        %1300 = vmatprep.subr.bf16.mxu0 %v1237
        %1301 = vmatpush1.bf16.msra.mxu0 %v1236
        %1302 = vmatprep.subr.bf16.mxu0 %v1239
        %1303 = vmatpush1.bf16.msra.mxu0 %v1238
        %1304 = vmatprep.subr.bf16.mxu0 %v1241
        %1305 = vmatpush1.bf16.msra.mxu0 %v1240
        %1306 = vmatprep.subr.bf16.mxu0 %v1243
        %1307 = vmatpush1.bf16.msra.mxu0 %v1242
        %1308 = vmatprep.mubr.bf16.mxu0 %v1057
        %1309 = vmatmul.mubr.bf16.gmra.mrb[0].mxu0 %v1056
        %v1310 = vpop.f32.mrb[0].mxu0
        %v1311 = vadd.f32 %v1109, %v1310
        %v1312 = vpop.f32.mrb[0].mxu0
        %v1313 = vadd.f32 %v1113, %v1312
        %v1314 = vpop.f32.mrb[0].mxu0
        %v1315 = vadd.f32 %v1109, %v1314
        %v1316 = vpop.f32.mrb[0].mxu0
        %v1317 = vadd.f32 %v1113, %v1316
        %1318 = vmatprep.mubr.bf16.mxu0 %v1059
        %1319 = vmatmul.mubr.bf16.gmra.mrb[0].mxu0 %v1058
        %v1320 = vpop.f32.mrb[0].mxu0
        %v1321 = vadd.f32 %v1109, %v1320
        %v1322 = vpop.f32.mrb[0].mxu0
        %v1323 = vadd.f32 %v1113, %v1322
        %v1324 = vpop.f32.mrb[0].mxu0
        %v1325 = vadd.f32 %v1109, %v1324
        %v1326 = vpop.f32.mrb[0].mxu0
        %v1327 = vadd.f32 %v1113, %v1326
        %1328 = vmatprep.mubr.bf16.mxu0 %v1061
        %1329 = vmatmul.mubr.bf16.gmra.mrb[0].mxu0 %v1060
        %v1330 = vpop.f32.mrb[0].mxu0
        %v1331 = vadd.f32 %v1109, %v1330
        %v1332 = vpop.f32.mrb[0].mxu0
        %v1333 = vadd.f32 %v1113, %v1332
        %v1334 = vpop.f32.mrb[0].mxu0
        %v1335 = vadd.f32 %v1109, %v1334
        %v1336 = vpop.f32.mrb[0].mxu0
        %v1337 = vadd.f32 %v1113, %v1336
        %1338 = vmatprep.mubr.bf16.mxu0 %v1063
        %1339 = vmatmul.mubr.bf16.gmra.mrb[0].mxu0 %v1062
        %v1340 = vpop.f32.mrb[0].mxu0
        %v1341 = vadd.f32 %v1109, %v1340
        %v1342 = vpop.f32.mrb[0].mxu0
        %v1343 = vadd.f32 %v1113, %v1342
        %v1344 = vpop.f32.mrb[0].mxu0
        %v1345 = vadd.f32 %v1109, %v1344
        %v1346 = vpop.f32.mrb[0].mxu0
        %v1347 = vadd.f32 %v1113, %v1346
        %1348 = vmatprep.mubr.bf16.mxu0 %v1065
        %1349 = vmatmul.mubr.bf16.gmra.mrb[0].mxu0 %v1064
        %v1350 = vpop.f32.mrb[0].mxu0
        %v1351 = vadd.f32 %v1109, %v1350
        %v1352 = vpop.f32.mrb[0].mxu0
        %v1353 = vadd.f32 %v1113, %v1352
        %v1354 = vpop.f32.mrb[0].mxu0
        %v1355 = vadd.f32 %v1109, %v1354
        %v1356 = vpop.f32.mrb[0].mxu0
        %v1357 = vadd.f32 %v1113, %v1356
        %1358 = vmatprep.mubr.bf16.mxu0 %v1067
        %1359 = vmatmul.mubr.bf16.gmra.mrb[0].mxu0 %v1066
        %v1360 = vpop.f32.mrb[0].mxu0
        %v1361 = vadd.f32 %v1109, %v1360
        %v1362 = vpop.f32.mrb[0].mxu0
        %v1363 = vadd.f32 %v1113, %v1362
        %v1364 = vpop.f32.mrb[0].mxu0
        %v1365 = vadd.f32 %v1109, %v1364
        %v1366 = vpop.f32.mrb[0].mxu0
        %v1367 = vadd.f32 %v1113, %v1366
        %1368 = vmatprep.mubr.bf16.mxu0 %v1069
        %1369 = vmatmul.mubr.bf16.gmra.mrb[0].mxu0 %v1068
        %v1370 = vpop.f32.mrb[0].mxu0
        %v1371 = vadd.f32 %v1109, %v1370
        %v1372 = vpop.f32.mrb[0].mxu0
        %v1373 = vadd.f32 %v1113, %v1372
        %v1374 = vpop.f32.mrb[0].mxu0
        %v1375 = vadd.f32 %v1109, %v1374
        %v1376 = vpop.f32.mrb[0].mxu0
        %v1377 = vadd.f32 %v1113, %v1376
        %1378 = vmatprep.mubr.bf16.mxu0 %v1071
        %1379 = vmatmul.mubr.bf16.gmra.mrb[0].mxu0 %v1070
        %v1380 = vpop.f32.mrb[0].mxu0
        %v1381 = vadd.f32 %v1109, %v1380
        %v1382 = vpop.f32.mrb[0].mxu0
        %v1383 = vadd.f32 %v1113, %v1382
        %v1384 = vpop.f32.mrb[0].mxu0
        %v1385 = vadd.f32 %v1109, %v1384
        %v1386 = vpop.f32.mrb[0].mxu0
        %v1387 = vadd.f32 %v1113, %v1386
        %1388 = vdwg.mxu0
        %vm1389 = vcmp.gt.f32.partialorder %v1311, 0.0
        %vm1390 = vcmp.gt.f32.partialorder %v1313, 0.0
        %vm1391 = vcmp.gt.f32.partialorder %v1315, 0.0
        %vm1392 = vcmp.gt.f32.partialorder %v1317, 0.0
        %vm1393 = vcmp.gt.f32.partialorder %v1321, 0.0
        %vm1394 = vcmp.gt.f32.partialorder %v1323, 0.0
        %vm1395 = vcmp.gt.f32.partialorder %v1325, 0.0
        %vm1396 = vcmp.gt.f32.partialorder %v1327, 0.0
        %vm1397 = vcmp.gt.f32.partialorder %v1331, 0.0
        %vm1398 = vcmp.gt.f32.partialorder %v1333, 0.0
        %vm1399 = vcmp.gt.f32.partialorder %v1335, 0.0
        %vm1400 = vcmp.gt.f32.partialorder %v1337, 0.0
        %vm1401 = vcmp.gt.f32.partialorder %v1341, 0.0
        %vm1402 = vcmp.gt.f32.partialorder %v1343, 0.0
        %vm1403 = vcmp.gt.f32.partialorder %v1345, 0.0
        %vm1404 = vcmp.gt.f32.partialorder %v1347, 0.0
        %vm1405 = vcmp.gt.f32.partialorder %v1351, 0.0
        %vm1406 = vcmp.gt.f32.partialorder %v1353, 0.0
        %vm1407 = vcmp.gt.f32.partialorder %v1355, 0.0
        %vm1408 = vcmp.gt.f32.partialorder %v1357, 0.0
        %vm1409 = vcmp.gt.f32.partialorder %v1361, 0.0
        %vm1410 = vcmp.gt.f32.partialorder %v1363, 0.0
        %vm1411 = vcmp.gt.f32.partialorder %v1365, 0.0
        %vm1412 = vcmp.gt.f32.partialorder %v1367, 0.0
        %vm1413 = vcmp.gt.f32.partialorder %v1371, 0.0
        %vm1414 = vcmp.gt.f32.partialorder %v1373, 0.0
        %vm1415 = vcmp.gt.f32.partialorder %v1375, 0.0
        %vm1416 = vcmp.gt.f32.partialorder %v1377, 0.0
        %vm1417 = vcmp.gt.f32.partialorder %v1381, 0.0
        %vm1418 = vcmp.gt.f32.partialorder %v1383, 0.0
        %vm1419 = vcmp.gt.f32.partialorder %v1385, 0.0
        %vm1420 = vcmp.gt.f32.partialorder %v1387, 0.0
        %v1421 = vmul.f32 %v1311, 0.2
        %v1422 = vmul.f32 %v1313, 0.2
        %v1423 = vmul.f32 %v1315, 0.2
        %v1424 = vmul.f32 %v1317, 0.2
        %v1425 = vmul.f32 %v1321, 0.2
        %v1426 = vmul.f32 %v1323, 0.2
        %v1427 = vmul.f32 %v1325, 0.2
        %v1428 = vmul.f32 %v1327, 0.2
        %v1429 = vmul.f32 %v1331, 0.2
        %v1430 = vmul.f32 %v1333, 0.2
        %v1431 = vmul.f32 %v1335, 0.2
        %v1432 = vmul.f32 %v1337, 0.2
        %v1433 = vmul.f32 %v1341, 0.2
        %v1434 = vmul.f32 %v1343, 0.2
        %v1435 = vmul.f32 %v1345, 0.2
        %v1436 = vmul.f32 %v1347, 0.2
        %v1437 = vmul.f32 %v1351, 0.2
        %v1438 = vmul.f32 %v1353, 0.2
        %v1439 = vmul.f32 %v1355, 0.2
        %v1440 = vmul.f32 %v1357, 0.2
        %v1441 = vmul.f32 %v1361, 0.2
        %v1442 = vmul.f32 %v1363, 0.2
        %v1443 = vmul.f32 %v1365, 0.2
        %v1444 = vmul.f32 %v1367, 0.2
        %v1445 = vmul.f32 %v1371, 0.2
        %v1446 = vmul.f32 %v1373, 0.2
        %v1447 = vmul.f32 %v1375, 0.2
        %v1448 = vmul.f32 %v1377, 0.2
        %v1449 = vmul.f32 %v1381, 0.2
        %v1450 = vmul.f32 %v1383, 0.2
        %v1451 = vmul.f32 %v1385, 0.2
        %v1452 = vmul.f32 %v1387, 0.2
        %v1453 = vsel %vm1389, %v1311, %v1421
        %v1454 = vsel %vm1390, %v1313, %v1422
        %v1455 = vsel %vm1391, %v1315, %v1423
        %v1456 = vsel %vm1392, %v1317, %v1424
        %v1457 = vsel %vm1393, %v1321, %v1425
        %v1458 = vsel %vm1394, %v1323, %v1426
        %v1459 = vsel %vm1395, %v1325, %v1427
        %v1460 = vsel %vm1396, %v1327, %v1428
        %v1461 = vsel %vm1397, %v1331, %v1429
        %v1462 = vsel %vm1398, %v1333, %v1430
        %v1463 = vsel %vm1399, %v1335, %v1431
        %v1464 = vsel %vm1400, %v1337, %v1432
        %v1465 = vsel %vm1401, %v1341, %v1433
        %v1466 = vsel %vm1402, %v1343, %v1434
        %v1467 = vsel %vm1403, %v1345, %v1435
        %v1468 = vsel %vm1404, %v1347, %v1436
        %v1469 = vsel %vm1405, %v1351, %v1437
        %v1470 = vsel %vm1406, %v1353, %v1438
        %v1471 = vsel %vm1407, %v1355, %v1439
        %v1472 = vsel %vm1408, %v1357, %v1440
        %v1473 = vsel %vm1409, %v1361, %v1441
        %v1474 = vsel %vm1410, %v1363, %v1442
        %v1475 = vsel %vm1411, %v1365, %v1443
        %v1476 = vsel %vm1412, %v1367, %v1444
        %v1477 = vsel %vm1413, %v1371, %v1445
        %v1478 = vsel %vm1414, %v1373, %v1446
        %v1479 = vsel %vm1415, %v1375, %v1447
        %v1480 = vsel %vm1416, %v1377, %v1448
        %v1481 = vsel %vm1417, %v1381, %v1449
        %v1482 = vsel %vm1418, %v1383, %v1450
        %v1483 = vsel %vm1419, %v1385, %v1451
        %v1484 = vsel %vm1420, %v1387, %v1452
        %v1485 = vpack.c.bf16 %v1455, %v1453
        %v1486 = vpack.c.bf16 %v1456, %v1454
        %v1487 = vpack.c.bf16 %v1459, %v1457
        %v1488 = vpack.c.bf16 %v1460, %v1458
        %v1489 = vpack.c.bf16 %v1463, %v1461
        %v1490 = vpack.c.bf16 %v1464, %v1462
        %v1491 = vpack.c.bf16 %v1467, %v1465
        %v1492 = vpack.c.bf16 %v1468, %v1466
        %v1493 = vpack.c.bf16 %v1471, %v1469
        %v1494 = vpack.c.bf16 %v1472, %v1470
        %v1495 = vpack.c.bf16 %v1475, %v1473
        %v1496 = vpack.c.bf16 %v1476, %v1474
        %v1497 = vpack.c.bf16 %v1479, %v1477
        %v1498 = vpack.c.bf16 %v1480, %v1478
        %v1499 = vpack.c.bf16 %v1483, %v1481
        %v1500 = vpack.c.bf16 %v1484, %v1482
        %v1501 = vld [vmem:[#allocation11] sm:$0xf]
        %v1502 = vld [vmem:[#allocation11 + $0x4] sm:$0xf]
        %v1503 = vld [vmem:[#allocation11 + $0x8] sm:$0xf]
        %v1504 = vld [vmem:[#allocation11 + $0xc] sm:$0xf]
        %v1505 = vld [vmem:[#allocation11 + $0x10] sm:$0xf]
        %v1506 = vld [vmem:[#allocation11 + $0x14] sm:$0xf]
        %v1507 = vld [vmem:[#allocation11 + $0x18] sm:$0xf]
        %v1508 = vld [vmem:[#allocation11 + $0x1c] sm:$0xf]
        %v1509 = vld [vmem:[#allocation11 + $0x20] sm:$0xf]
        %v1510 = vld [vmem:[#allocation11 + $0x24] sm:$0xf]
        %v1511 = vld [vmem:[#allocation11 + $0x28] sm:$0xf]
        %v1512 = vld [vmem:[#allocation11 + $0x2c] sm:$0xf]
        %v1513 = vld [vmem:[#allocation11 + $0x30] sm:$0xf]
        %v1514 = vld [vmem:[#allocation11 + $0x34] sm:$0xf]
        %v1515 = vld [vmem:[#allocation11 + $0x38] sm:$0xf]
        %v1516 = vld [vmem:[#allocation11 + $0x3c] sm:$0xf]
        %v1517 = vld [vmem:[#allocation11 + $0x40] sm:$0xf]
        %v1518 = vld [vmem:[#allocation11 + $0x44] sm:$0xf]
        %v1519 = vld [vmem:[#allocation11 + $0x48] sm:$0xf]
        %v1520 = vld [vmem:[#allocation11 + $0x4c] sm:$0xf]
        %v1521 = vld [vmem:[#allocation11 + $0x50] sm:$0xf]
        %v1522 = vld [vmem:[#allocation11 + $0x54] sm:$0xf]
        %v1523 = vld [vmem:[#allocation11 + $0x58] sm:$0xf]
        %v1524 = vld [vmem:[#allocation11 + $0x5c] sm:$0xf]
        %v1525 = vld [vmem:[#allocation11 + $0x60] sm:$0xf]
        %v1526 = vld [vmem:[#allocation11 + $0x64] sm:$0xf]
        %v1527 = vld [vmem:[#allocation11 + $0x68] sm:$0xf]
        %v1528 = vld [vmem:[#allocation11 + $0x6c] sm:$0xf]
        %v1529 = vld [vmem:[#allocation11 + $0x70] sm:$0xf]
        %v1530 = vld [vmem:[#allocation11 + $0x74] sm:$0xf]
        %v1531 = vld [vmem:[#allocation11 + $0x78] sm:$0xf]
        %v1532 = vld [vmem:[#allocation11 + $0x7c] sm:$0xf]
        %v1533 = vld [vmem:[%s7] sm:$0x1]
        %v1535 = vlaneseq
        %v1536 = vshrl.u32 %v1535, 7
        %v1537 = vsub.s32 0, %v1536
        %v1538 = vrot.slane %v1533, %v1537
        %v1572 = vunpack.c.l.b16 %v1501
        %v1573 = vunpack.c.l.b16 %v1502
        %v1574 = vunpack.c.l.b16 %v1503
        %v1575 = vunpack.c.l.b16 %v1504
        %v1576 = vunpack.c.l.b16 %v1505
        %v1577 = vunpack.c.l.b16 %v1506
        %v1578 = vunpack.c.l.b16 %v1507
        %v1579 = vunpack.c.l.b16 %v1508
        %v1580 = vunpack.c.l.b16 %v1509
        %v1581 = vunpack.c.l.b16 %v1510
        %v1582 = vunpack.c.l.b16 %v1511
        %v1583 = vunpack.c.l.b16 %v1512
        %v1584 = vunpack.c.l.b16 %v1513
        %v1585 = vunpack.c.l.b16 %v1514
        %v1586 = vunpack.c.l.b16 %v1515
        %v1587 = vunpack.c.l.b16 %v1516
        %v1588 = vunpack.c.l.b16 %v1517
        %v1589 = vunpack.c.l.b16 %v1518
        %v1590 = vunpack.c.l.b16 %v1519
        %v1591 = vunpack.c.l.b16 %v1520
        %v1592 = vunpack.c.l.b16 %v1521
        %v1593 = vunpack.c.l.b16 %v1522
        %v1594 = vunpack.c.l.b16 %v1523
        %v1595 = vunpack.c.l.b16 %v1524
        %v1596 = vunpack.c.l.b16 %v1525
        %v1597 = vunpack.c.l.b16 %v1526
        %v1598 = vunpack.c.l.b16 %v1527
        %v1599 = vunpack.c.l.b16 %v1528
        %v1600 = vunpack.c.l.b16 %v1529
        %v1601 = vunpack.c.l.b16 %v1530
        %v1602 = vunpack.c.l.b16 %v1531
        %v1603 = vunpack.c.l.b16 %v1532
        %v1604 = vpack.c.b16 %v1573, %v1572
        %v1605 = vpack.c.b16 %v1575, %v1574
        %v1606 = vpack.c.b16 %v1577, %v1576
        %v1607 = vpack.c.b16 %v1579, %v1578
        %v1608 = vpack.c.b16 %v1581, %v1580
        %v1609 = vpack.c.b16 %v1583, %v1582
        %v1610 = vpack.c.b16 %v1585, %v1584
        %v1611 = vpack.c.b16 %v1587, %v1586
        %v1612 = vpack.c.b16 %v1589, %v1588
        %v1613 = vpack.c.b16 %v1591, %v1590
        %v1614 = vpack.c.b16 %v1593, %v1592
        %v1615 = vpack.c.b16 %v1595, %v1594
        %v1616 = vpack.c.b16 %v1597, %v1596
        %v1617 = vpack.c.b16 %v1599, %v1598
        %v1618 = vpack.c.b16 %v1601, %v1600
        %v1619 = vpack.c.b16 %v1603, %v1602
        %1636 = vmatprep.subr.bf16.mxu0 0
        %1637 = vmatpush1.bf16.msra.mxu0 %v1604
        %1638 = vmatprep.subr.bf16.mxu0 0
        %1639 = vmatpush1.bf16.msra.mxu0 %v1605
        %1640 = vmatprep.subr.bf16.mxu0 0
        %1641 = vmatpush1.bf16.msra.mxu0 %v1606
        %1642 = vmatprep.subr.bf16.mxu0 0
        %1643 = vmatpush1.bf16.msra.mxu0 %v1607
        %1644 = vmatprep.subr.bf16.mxu0 0
        %1645 = vmatpush1.bf16.msra.mxu0 %v1608
        %1646 = vmatprep.subr.bf16.mxu0 0
        %1647 = vmatpush1.bf16.msra.mxu0 %v1609
        %1648 = vmatprep.subr.bf16.mxu0 0
        %1649 = vmatpush1.bf16.msra.mxu0 %v1610
        %1650 = vmatprep.subr.bf16.mxu0 0
        %1651 = vmatpush1.bf16.msra.mxu0 %v1611
        %1652 = vmatprep.subr.bf16.mxu0 0
        %1653 = vmatpush1.bf16.msra.mxu0 %v1612
        %1654 = vmatprep.subr.bf16.mxu0 0
        %1655 = vmatpush1.bf16.msra.mxu0 %v1613
        %1656 = vmatprep.subr.bf16.mxu0 0
        %1657 = vmatpush1.bf16.msra.mxu0 %v1614
        %1658 = vmatprep.subr.bf16.mxu0 0
        %1659 = vmatpush1.bf16.msra.mxu0 %v1615
        %1660 = vmatprep.subr.bf16.mxu0 0
        %1661 = vmatpush1.bf16.msra.mxu0 %v1616
        %1662 = vmatprep.subr.bf16.mxu0 0
        %1663 = vmatpush1.bf16.msra.mxu0 %v1617
        %1664 = vmatprep.subr.bf16.mxu0 0
        %1665 = vmatpush1.bf16.msra.mxu0 %v1618
        %1666 = vmatprep.subr.bf16.mxu0 0
        %1667 = vmatpush1.bf16.msra.mxu0 %v1619
        %1668 = vmatprep.mubr.bf16.mxu0 %v1486
        %1669 = vmatmul.mubr.bf16.gmra.mrb[0].mxu0 %v1485
        %v1670 = vpop.f32.mrb[0].mxu0
        %v1671 = vadd.f32 %v1538, %v1670
        %v1672 = vpop.f32.mrb[0].mxu0
        %v1673 = vpop.f32.mrb[0].mxu0
        %v1674 = vadd.f32 %v1538, %v1673
        %v1675 = vpop.f32.mrb[0].mxu0
        %1676 = vmatprep.mubr.bf16.mxu0 %v1488
        %1677 = vmatmul.mubr.bf16.gmra.mrb[0].mxu0 %v1487
        %v1678 = vpop.f32.mrb[0].mxu0
        %v1679 = vadd.f32 %v1538, %v1678
        %v1680 = vpop.f32.mrb[0].mxu0
        %v1681 = vpop.f32.mrb[0].mxu0
        %v1682 = vadd.f32 %v1538, %v1681
        %v1683 = vpop.f32.mrb[0].mxu0
        %1684 = vmatprep.mubr.bf16.mxu0 %v1490
        %1685 = vmatmul.mubr.bf16.gmra.mrb[0].mxu0 %v1489
        %v1686 = vpop.f32.mrb[0].mxu0
        %v1687 = vadd.f32 %v1538, %v1686
        %v1688 = vpop.f32.mrb[0].mxu0
        %v1689 = vpop.f32.mrb[0].mxu0
        %v1690 = vadd.f32 %v1538, %v1689
        %v1691 = vpop.f32.mrb[0].mxu0
        %1692 = vmatprep.mubr.bf16.mxu0 %v1492
        %1693 = vmatmul.mubr.bf16.gmra.mrb[0].mxu0 %v1491
        %v1694 = vpop.f32.mrb[0].mxu0
        %v1695 = vadd.f32 %v1538, %v1694
        %v1696 = vpop.f32.mrb[0].mxu0
        %v1697 = vpop.f32.mrb[0].mxu0
        %v1698 = vadd.f32 %v1538, %v1697
        %v1699 = vpop.f32.mrb[0].mxu0
        %1700 = vmatprep.mubr.bf16.mxu0 %v1494
        %1701 = vmatmul.mubr.bf16.gmra.mrb[0].mxu0 %v1493
        %v1702 = vpop.f32.mrb[0].mxu0
        %v1703 = vadd.f32 %v1538, %v1702
        %v1704 = vpop.f32.mrb[0].mxu0
        %v1705 = vpop.f32.mrb[0].mxu0
        %v1706 = vadd.f32 %v1538, %v1705
        %v1707 = vpop.f32.mrb[0].mxu0
        %1708 = vmatprep.mubr.bf16.mxu0 %v1496
        %1709 = vmatmul.mubr.bf16.gmra.mrb[0].mxu0 %v1495
        %v1710 = vpop.f32.mrb[0].mxu0
        %v1711 = vadd.f32 %v1538, %v1710
        %v1712 = vpop.f32.mrb[0].mxu0
        %v1713 = vpop.f32.mrb[0].mxu0
        %v1714 = vadd.f32 %v1538, %v1713
        %v1715 = vpop.f32.mrb[0].mxu0
        %1716 = vmatprep.mubr.bf16.mxu0 %v1498
        %1717 = vmatmul.mubr.bf16.gmra.mrb[0].mxu0 %v1497
        %v1718 = vpop.f32.mrb[0].mxu0
        %v1719 = vadd.f32 %v1538, %v1718
        %v1720 = vpop.f32.mrb[0].mxu0
        %v1721 = vpop.f32.mrb[0].mxu0
        %v1722 = vadd.f32 %v1538, %v1721
        %v1723 = vpop.f32.mrb[0].mxu0
        %1724 = vmatprep.mubr.bf16.mxu0 %v1500
        %1725 = vmatmul.mubr.bf16.gmra.mrb[0].mxu0 %v1499
        %v1726 = vpop.f32.mrb[0].mxu0
        %v1727 = vadd.f32 %v1538, %v1726
        %v1728 = vpop.f32.mrb[0].mxu0
        %v1729 = vpop.f32.mrb[0].mxu0
        %v1730 = vadd.f32 %v1538, %v1729
        %v1731 = vpop.f32.mrb[0].mxu0
        %1732 = vdwg.mxu0
        %1733 = vst [vmem:[%s536] sm:$0xff] %v1671
        %1734 = vst [vmem:[%s536 + $0x8] sm:$0xff] %v1674
        %1735 = vst [vmem:[%s536 + $0x10] sm:$0xff] %v1679
        %1736 = vst [vmem:[%s536 + $0x18] sm:$0xff] %v1682
        %1737 = vst [vmem:[%s536 + $0x20] sm:$0xff] %v1687
        %1738 = vst [vmem:[%s536 + $0x28] sm:$0xff] %v1690
        %1739 = vst [vmem:[%s536 + $0x30] sm:$0xff] %v1695
        %1740 = vst [vmem:[%s536 + $0x38] sm:$0xff] %v1698
        %1741 = vst [vmem:[%s536 + $0x40] sm:$0xff] %v1703
        %1742 = vst [vmem:[%s536 + $0x48] sm:$0xff] %v1706
        %1743 = vst [vmem:[%s536 + $0x50] sm:$0xff] %v1711
        %1744 = vst [vmem:[%s536 + $0x58] sm:$0xff] %v1714
        %1745 = vst [vmem:[%s536 + $0x60] sm:$0xff] %v1719
        %1746 = vst [vmem:[%s536 + $0x68] sm:$0xff] %v1722
        %1747 = vst [vmem:[%s536 + $0x70] sm:$0xff] %v1727
        %1748 = vst [vmem:[%s536 + $0x78] sm:$0xff] %v1730
        %v1749 = vld [vmem:[%s477] sm:$0xf]
        %v1750 = vld [vmem:[%s477 + $0x4] sm:$0xf]
        %v1751 = vld [vmem:[%s477 + $0x8] sm:$0xf]
        %v1752 = vld [vmem:[%s477 + $0xc] sm:$0xf]
        %v1753 = vld [vmem:[%s477 + $0x10] sm:$0xf]
        %v1754 = vld [vmem:[%s477 + $0x14] sm:$0xf]
        %v1755 = vld [vmem:[%s477 + $0x18] sm:$0xf]
        %v1756 = vld [vmem:[%s477 + $0x1c] sm:$0xf]
        %v1757 = vld [vmem:[%s477 + $0x20] sm:$0xf]
        %v1758 = vld [vmem:[%s477 + $0x24] sm:$0xf]
        %v1759 = vld [vmem:[%s477 + $0x28] sm:$0xf]
        %v1760 = vld [vmem:[%s477 + $0x2c] sm:$0xf]
        %v1761 = vld [vmem:[%s477 + $0x30] sm:$0xf]
        %v1762 = vld [vmem:[%s477 + $0x34] sm:$0xf]
        %v1763 = vld [vmem:[%s477 + $0x38] sm:$0xf]
        %v1764 = vld [vmem:[%s477 + $0x3c] sm:$0xf]
        %v1765 = vld [vmem:[#allocation12] sm:$0xff]
        %v1766 = vld [vmem:[#allocation12 + $0x8] sm:$0xff]
        %v1767 = vld [vmem:[#allocation12 + $0x10] sm:$0xff]
        %v1768 = vld [vmem:[#allocation12 + $0x18] sm:$0xff]
        %v1769 = vld [vmem:[#allocation12 + $0x20] sm:$0xff]
        %v1770 = vld [vmem:[#allocation12 + $0x28] sm:$0xff]
        %v1771 = vld [vmem:[#allocation12 + $0x30] sm:$0xff]
        %v1772 = vld [vmem:[#allocation12 + $0x38] sm:$0xff]
        %v1773 = vld [vmem:[#allocation12 + $0x40] sm:$0xff]
        %v1774 = vld [vmem:[#allocation12 + $0x48] sm:$0xff]
        %v1775 = vld [vmem:[#allocation12 + $0x50] sm:$0xff]
        %v1776 = vld [vmem:[#allocation12 + $0x58] sm:$0xff]
        %v1777 = vld [vmem:[#allocation12 + $0x60] sm:$0xff]
        %v1778 = vld [vmem:[#allocation12 + $0x68] sm:$0xff]
        %v1779 = vld [vmem:[#allocation12 + $0x70] sm:$0xff]
        %v1780 = vld [vmem:[#allocation12 + $0x78] sm:$0xff]
        %v1781 = vld [vmem:[%s9] sm:$0x3]
        %v1783 = vlaneseq
        %v1784 = vshrl.u32 %v1783, 7
        %v1785 = vsub.s32 0, %v1784
        %v1786 = vrot.slane %v1781, %v1785
        %v1787 = vlaneseq
        %v1788 = vshrl.u32 %v1787, 7
        %v1789 = vsub.s32 1, %v1788
        %v1790 = vrot.slane %v1781, %v1789
        %v1809 = vunpack.c.l.b16 %v1749
        %v1810 = vunpack.c.l.b16 %v1750
        %v1811 = vunpack.c.l.b16 %v1751
        %v1812 = vunpack.c.l.b16 %v1752
        %v1813 = vunpack.c.l.b16 %v1753
        %v1814 = vunpack.c.l.b16 %v1754
        %v1815 = vunpack.c.l.b16 %v1755
        %v1816 = vunpack.c.l.b16 %v1756
        %v1817 = vunpack.c.l.b16 %v1757
        %v1818 = vunpack.c.l.b16 %v1758
        %v1819 = vunpack.c.l.b16 %v1759
        %v1820 = vunpack.c.l.b16 %v1760
        %v1821 = vunpack.c.l.b16 %v1761
        %v1822 = vunpack.c.l.b16 %v1762
        %v1823 = vunpack.c.l.b16 %v1763
        %v1824 = vunpack.c.l.b16 %v1764
        %v1825 = vpack.c.b16 %v1810, %v1809
        %v1826 = vpack.c.b16 %v1812, %v1811
        %v1827 = vpack.c.b16 %v1814, %v1813
        %v1828 = vpack.c.b16 %v1816, %v1815
        %v1829 = vpack.c.b16 %v1818, %v1817
        %v1830 = vpack.c.b16 %v1820, %v1819
        %v1831 = vpack.c.b16 %v1822, %v1821
        %v1832 = vpack.c.b16 %v1824, %v1823
        %v1857 = vunpack.c.l.b16 %v1765
        %v1858 = vunpack.c.h.b16 %v1765
        %v1859 = vunpack.c.l.b16 %v1766
        %v1860 = vunpack.c.h.b16 %v1766
        %v1861 = vunpack.c.l.b16 %v1767
        %v1862 = vunpack.c.h.b16 %v1767
        %v1863 = vunpack.c.l.b16 %v1768
        %v1864 = vunpack.c.h.b16 %v1768
        %v1865 = vunpack.c.l.b16 %v1769
        %v1866 = vunpack.c.h.b16 %v1769
        %v1867 = vunpack.c.l.b16 %v1770
        %v1868 = vunpack.c.h.b16 %v1770
        %v1869 = vunpack.c.l.b16 %v1771
        %v1870 = vunpack.c.h.b16 %v1771
        %v1871 = vunpack.c.l.b16 %v1772
        %v1872 = vunpack.c.h.b16 %v1772
        %v1873 = vunpack.c.l.b16 %v1773
        %v1874 = vunpack.c.h.b16 %v1773
        %v1875 = vunpack.c.l.b16 %v1774
        %v1876 = vunpack.c.h.b16 %v1774
        %v1877 = vunpack.c.l.b16 %v1775
        %v1878 = vunpack.c.h.b16 %v1775
        %v1879 = vunpack.c.l.b16 %v1776
        %v1880 = vunpack.c.h.b16 %v1776
        %v1881 = vunpack.c.l.b16 %v1777
        %v1882 = vunpack.c.h.b16 %v1777
        %v1883 = vunpack.c.l.b16 %v1778
        %v1884 = vunpack.c.h.b16 %v1778
        %v1885 = vunpack.c.l.b16 %v1779
        %v1886 = vunpack.c.h.b16 %v1779
        %v1887 = vunpack.c.l.b16 %v1780
        %v1888 = vunpack.c.h.b16 %v1780
        %v1889 = vpack.c.b16 %v1859, %v1857
        %v1890 = vpack.c.b16 %v1860, %v1858
        %v1891 = vpack.c.b16 %v1863, %v1861
        %v1892 = vpack.c.b16 %v1864, %v1862
        %v1893 = vpack.c.b16 %v1867, %v1865
        %v1894 = vpack.c.b16 %v1868, %v1866
        %v1895 = vpack.c.b16 %v1871, %v1869
        %v1896 = vpack.c.b16 %v1872, %v1870
        %v1897 = vpack.c.b16 %v1875, %v1873
        %v1898 = vpack.c.b16 %v1876, %v1874
        %v1899 = vpack.c.b16 %v1879, %v1877
        %v1900 = vpack.c.b16 %v1880, %v1878
        %v1901 = vpack.c.b16 %v1883, %v1881
        %v1902 = vpack.c.b16 %v1884, %v1882
        %v1903 = vpack.c.b16 %v1887, %v1885
        %v1904 = vpack.c.b16 %v1888, %v1886
        %1921 = vmatprep.subr.bf16.mxu0 %v1890
        %1922 = vmatpush1.bf16.msra.mxu0 %v1889
        %1923 = vmatprep.subr.bf16.mxu0 %v1892
        %1924 = vmatpush1.bf16.msra.mxu0 %v1891
        %1925 = vmatprep.subr.bf16.mxu0 %v1894
        %1926 = vmatpush1.bf16.msra.mxu0 %v1893
        %1927 = vmatprep.subr.bf16.mxu0 %v1896
        %1928 = vmatpush1.bf16.msra.mxu0 %v1895
        %1929 = vmatprep.subr.bf16.mxu0 %v1898
        %1930 = vmatpush1.bf16.msra.mxu0 %v1897
        %1931 = vmatprep.subr.bf16.mxu0 %v1900
        %1932 = vmatpush1.bf16.msra.mxu0 %v1899
        %1933 = vmatprep.subr.bf16.mxu0 %v1902
        %1934 = vmatpush1.bf16.msra.mxu0 %v1901
        %1935 = vmatprep.subr.bf16.mxu0 %v1904
        %1936 = vmatpush1.bf16.msra.mxu0 %v1903
        %1937 = vmatprep.subr.bf16.mxu0 0
        %1938 = vmatpush1.bf16.msra.mxu0 0
        %1939 = vmatprep.subr.bf16.mxu0 0
        %1940 = vmatpush1.bf16.msra.mxu0 0
        %1941 = vmatprep.subr.bf16.mxu0 0
        %1942 = vmatpush1.bf16.msra.mxu0 0
        %1943 = vmatprep.subr.bf16.mxu0 0
        %1944 = vmatpush1.bf16.msra.mxu0 0
        %1945 = vmatprep.subr.bf16.mxu0 0
        %1946 = vmatpush1.bf16.msra.mxu0 0
        %1947 = vmatprep.subr.bf16.mxu0 0
        %1948 = vmatpush1.bf16.msra.mxu0 0
        %1949 = vmatprep.subr.bf16.mxu0 0
        %1950 = vmatpush1.bf16.msra.mxu0 0
        %1951 = vmatprep.subr.bf16.mxu0 0
        %1952 = vmatpush1.bf16.msra.mxu0 0
        %1953 = vmatprep.mubr.bf16.mxu0 0
        %1954 = vmatmul.mubr.bf16.gmra.mrb[0].mxu0 %v1825
        %v1955 = vpop.f32.mrb[0].mxu0
        %v1956 = vadd.f32 %v1786, %v1955
        %v1957 = vpop.f32.mrb[0].mxu0
        %v1958 = vadd.f32 %v1790, %v1957
        %v1959 = vpop.f32.mrb[0].mxu0
        %v1960 = vadd.f32 %v1786, %v1959
        %v1961 = vpop.f32.mrb[0].mxu0
        %v1962 = vadd.f32 %v1790, %v1961
        %1963 = vmatprep.mubr.bf16.mxu0 0
        %1964 = vmatmul.mubr.bf16.gmra.mrb[0].mxu0 %v1826
        %v1965 = vpop.f32.mrb[0].mxu0
        %v1966 = vadd.f32 %v1786, %v1965
        %v1967 = vpop.f32.mrb[0].mxu0
        %v1968 = vadd.f32 %v1790, %v1967
        %v1969 = vpop.f32.mrb[0].mxu0
        %v1970 = vadd.f32 %v1786, %v1969
        %v1971 = vpop.f32.mrb[0].mxu0
        %v1972 = vadd.f32 %v1790, %v1971
        %1973 = vmatprep.mubr.bf16.mxu0 0
        %1974 = vmatmul.mubr.bf16.gmra.mrb[0].mxu0 %v1827
        %v1975 = vpop.f32.mrb[0].mxu0
        %v1976 = vadd.f32 %v1786, %v1975
        %v1977 = vpop.f32.mrb[0].mxu0
        %v1978 = vadd.f32 %v1790, %v1977
        %v1979 = vpop.f32.mrb[0].mxu0
        %v1980 = vadd.f32 %v1786, %v1979
        %v1981 = vpop.f32.mrb[0].mxu0
        %v1982 = vadd.f32 %v1790, %v1981
        %1983 = vmatprep.mubr.bf16.mxu0 0
        %1984 = vmatmul.mubr.bf16.gmra.mrb[0].mxu0 %v1828
        %v1985 = vpop.f32.mrb[0].mxu0
        %v1986 = vadd.f32 %v1786, %v1985
        %v1987 = vpop.f32.mrb[0].mxu0
        %v1988 = vadd.f32 %v1790, %v1987
        %v1989 = vpop.f32.mrb[0].mxu0
        %v1990 = vadd.f32 %v1786, %v1989
        %v1991 = vpop.f32.mrb[0].mxu0
        %v1992 = vadd.f32 %v1790, %v1991
        %1993 = vmatprep.mubr.bf16.mxu0 0
        %1994 = vmatmul.mubr.bf16.gmra.mrb[0].mxu0 %v1829
        %v1995 = vpop.f32.mrb[0].mxu0
        %v1996 = vadd.f32 %v1786, %v1995
        %v1997 = vpop.f32.mrb[0].mxu0
        %v1998 = vadd.f32 %v1790, %v1997
        %v1999 = vpop.f32.mrb[0].mxu0
        %v2000 = vadd.f32 %v1786, %v1999
        %v2001 = vpop.f32.mrb[0].mxu0
        %v2002 = vadd.f32 %v1790, %v2001
        %2003 = vmatprep.mubr.bf16.mxu0 0
        %2004 = vmatmul.mubr.bf16.gmra.mrb[0].mxu0 %v1830
        %v2005 = vpop.f32.mrb[0].mxu0
        %v2006 = vadd.f32 %v1786, %v2005
        %v2007 = vpop.f32.mrb[0].mxu0
        %v2008 = vadd.f32 %v1790, %v2007
        %v2009 = vpop.f32.mrb[0].mxu0
        %v2010 = vadd.f32 %v1786, %v2009
        %v2011 = vpop.f32.mrb[0].mxu0
        %v2012 = vadd.f32 %v1790, %v2011
        %2013 = vmatprep.mubr.bf16.mxu0 0
        %2014 = vmatmul.mubr.bf16.gmra.mrb[0].mxu0 %v1831
        %v2015 = vpop.f32.mrb[0].mxu0
        %v2016 = vadd.f32 %v1786, %v2015
        %v2017 = vpop.f32.mrb[0].mxu0
        %v2018 = vadd.f32 %v1790, %v2017
        %v2019 = vpop.f32.mrb[0].mxu0
        %v2020 = vadd.f32 %v1786, %v2019
        %v2021 = vpop.f32.mrb[0].mxu0
        %v2022 = vadd.f32 %v1790, %v2021
        %2023 = vmatprep.mubr.bf16.mxu0 0
        %2024 = vmatmul.mubr.bf16.gmra.mrb[0].mxu0 %v1832
        %v2025 = vpop.f32.mrb[0].mxu0
        %v2026 = vadd.f32 %v1786, %v2025
        %v2027 = vpop.f32.mrb[0].mxu0
        %v2028 = vadd.f32 %v1790, %v2027
        %v2029 = vpop.f32.mrb[0].mxu0
        %v2030 = vadd.f32 %v1786, %v2029
        %v2031 = vpop.f32.mrb[0].mxu0
        %v2032 = vadd.f32 %v1790, %v2031
        %2033 = vdwg.mxu0
        %v2034 = vmul.f32 %v1956, %v1453
        %v2035 = vmul.f32 %v1958, %v1454
        %v2036 = vmul.f32 %v1960, %v1455
        %v2037 = vmul.f32 %v1962, %v1456
        %v2038 = vmul.f32 %v1966, %v1457
        %v2039 = vmul.f32 %v1968, %v1458
        %v2040 = vmul.f32 %v1970, %v1459
        %v2041 = vmul.f32 %v1972, %v1460
        %v2042 = vmul.f32 %v1976, %v1461
        %v2043 = vmul.f32 %v1978, %v1462
        %v2044 = vmul.f32 %v1980, %v1463
        %v2045 = vmul.f32 %v1982, %v1464
        %v2046 = vmul.f32 %v1986, %v1465
        %v2047 = vmul.f32 %v1988, %v1466
        %v2048 = vmul.f32 %v1990, %v1467
        %v2049 = vmul.f32 %v1992, %v1468
        %v2050 = vmul.f32 %v1996, %v1469
        %v2051 = vmul.f32 %v1998, %v1470
        %v2052 = vmul.f32 %v2000, %v1471
        %v2053 = vmul.f32 %v2002, %v1472
        %v2054 = vmul.f32 %v2006, %v1473
        %v2055 = vmul.f32 %v2008, %v1474
        %v2056 = vmul.f32 %v2010, %v1475
        %v2057 = vmul.f32 %v2012, %v1476
        %v2058 = vmul.f32 %v2016, %v1477
        %v2059 = vmul.f32 %v2018, %v1478
        %v2060 = vmul.f32 %v2020, %v1479
        %v2061 = vmul.f32 %v2022, %v1480
        %v2062 = vmul.f32 %v2026, %v1481
        %v2063 = vmul.f32 %v2028, %v1482
        %v2064 = vmul.f32 %v2030, %v1483
        %v2065 = vmul.f32 %v2032, %v1484
        %2066 = vxpose.xlu0.b32.start [1/16] %v2034, 128
        %2067 = vxpose.xlu0.b32.cont [2/16] %v2036, 128
        %2068 = vxpose.xlu0.b32.cont [3/16] %v2038, 128
        %2069 = vxpose.xlu0.b32.cont [4/16] %v2040, 128
        %2070 = vxpose.xlu0.b32.cont [5/16] %v2042, 128
        %2071 = vxpose.xlu0.b32.cont [6/16] %v2044, 128
        %2072 = vxpose.xlu0.b32.cont [7/16] %v2046, 128
        %2073 = vxpose.xlu0.b32.cont [8/16] %v2048, 128
        %2074 = vxpose.xlu0.b32.cont [9/16] %v2050, 128
        %2075 = vxpose.xlu0.b32.cont [10/16] %v2052, 128
        %2076 = vxpose.xlu0.b32.cont [11/16] %v2054, 128
        %2077 = vxpose.xlu0.b32.cont [12/16] %v2056, 128
        %2078 = vxpose.xlu0.b32.cont [13/16] %v2058, 128
        %2079 = vxpose.xlu0.b32.cont [14/16] %v2060, 128
        %2080 = vxpose.xlu0.b32.cont [15/16] %v2062, 128
        %2081 = vxpose.xlu0.b32.end [16/16] %v2064, 128
        %v2082 = vpop.trf.xlu0
        %v2083 = vpop.trf.xlu0
        %v2084 = vpop.trf.xlu0
        %v2085 = vpop.trf.xlu0
        %v2086 = vpop.trf.xlu0
        %v2087 = vpop.trf.xlu0
        %v2088 = vpop.trf.xlu0
        %v2089 = vpop.trf.xlu0
        %v2090 = vpop.trf.xlu0
        %v2091 = vpop.trf.xlu0
        %v2092 = vpop.trf.xlu0
        %v2093 = vpop.trf.xlu0
        %v2094 = vpop.trf.xlu0
        %v2095 = vpop.trf.xlu0
        %v2096 = vpop.trf.xlu0
        %v2097 = vpop.trf.xlu0
        %2098 = vxpose.xlu0.b32.start [1/16] %v2035, 128
        %2099 = vxpose.xlu0.b32.cont [2/16] %v2037, 128
        %2100 = vxpose.xlu0.b32.cont [3/16] %v2039, 128
        %2101 = vxpose.xlu0.b32.cont [4/16] %v2041, 128
        %2102 = vxpose.xlu0.b32.cont [5/16] %v2043, 128
        %2103 = vxpose.xlu0.b32.cont [6/16] %v2045, 128
        %2104 = vxpose.xlu0.b32.cont [7/16] %v2047, 128
        %2105 = vxpose.xlu0.b32.cont [8/16] %v2049, 128
        %2106 = vxpose.xlu0.b32.cont [9/16] %v2051, 128
        %2107 = vxpose.xlu0.b32.cont [10/16] %v2053, 128
        %2108 = vxpose.xlu0.b32.cont [11/16] %v2055, 128
        %2109 = vxpose.xlu0.b32.cont [12/16] %v2057, 128
        %2110 = vxpose.xlu0.b32.cont [13/16] %v2059, 128
        %2111 = vxpose.xlu0.b32.cont [14/16] %v2061, 128
        %2112 = vxpose.xlu0.b32.cont [15/16] %v2063, 128
        %2113 = vxpose.xlu0.b32.end [16/16] %v2065, 128
        %v2114 = vpop.trf.xlu0
        %v2115 = vpop.trf.xlu0
        %v2116 = vpop.trf.xlu0
        %v2117 = vpop.trf.xlu0
        %v2118 = vpop.trf.xlu0
        %v2119 = vpop.trf.xlu0
        %v2120 = vpop.trf.xlu0
        %v2121 = vpop.trf.xlu0
        %v2122 = vpop.trf.xlu0
        %v2123 = vpop.trf.xlu0
        %v2124 = vpop.trf.xlu0
        %v2125 = vpop.trf.xlu0
        %v2126 = vpop.trf.xlu0
        %v2127 = vpop.trf.xlu0
        %v2128 = vpop.trf.xlu0
        %v2129 = vpop.trf.xlu0
        %v2130 = vadd.f32 %v2082, %v2083
        %v2131 = vadd.f32 %v2130, %v2084
        %v2132 = vadd.f32 %v2131, %v2085
        %v2133 = vadd.f32 %v2132, %v2086
        %v2134 = vadd.f32 %v2133, %v2087
        %v2135 = vadd.f32 %v2134, %v2088
        %v2136 = vadd.f32 %v2135, %v2089
        %v2137 = vadd.f32 %v2136, %v2090
        %v2138 = vadd.f32 %v2137, %v2091
        %v2139 = vadd.f32 %v2138, %v2092
        %v2140 = vadd.f32 %v2139, %v2093
        %v2141 = vadd.f32 %v2140, %v2094
        %v2142 = vadd.f32 %v2141, %v2095
        %v2143 = vadd.f32 %v2142, %v2096
        %v2144 = vadd.f32 %v2143, %v2097
        %v2145 = vadd.f32 %v2144, %v2114
        %v2146 = vadd.f32 %v2145, %v2115
        %v2147 = vadd.f32 %v2146, %v2116
        %v2148 = vadd.f32 %v2147, %v2117
        %v2149 = vadd.f32 %v2148, %v2118
        %v2150 = vadd.f32 %v2149, %v2119
        %v2151 = vadd.f32 %v2150, %v2120
        %v2152 = vadd.f32 %v2151, %v2121
        %v2153 = vadd.f32 %v2152, %v2122
        %v2154 = vadd.f32 %v2153, %v2123
        %v2155 = vadd.f32 %v2154, %v2124
        %v2156 = vadd.f32 %v2155, %v2125
        %v2157 = vadd.f32 %v2156, %v2126
        %v2158 = vadd.f32 %v2157, %v2127
        %v2159 = vadd.f32 %v2158, %v2128
        %v2160 = vadd.f32 %v2159, %v2129
        %v2161 = vrot.slane %v2160, 4
        %v2162 = vadd.f32 %v2160, %v2161
        %v2163 = vrot.slane %v2162, 2
        %v2164 = vadd.f32 %v2162, %v2163
        %v2165 = vrot.slane %v2164, 1
        %v2166 = vadd.f32 %v2164, %v2165
        %v2167 = vld [vmem:[#allocation2] sm:$0x1]
        %2169 = vset.pattern.permute.xlu0 0
        %2170 = vperm.xlu0 %2169, %v2167
        %v2171 = vpop.permute.xlu0 %2170
        %v2173 = vlaneseq
        %v2174 = vshrl.u32 %v2173, 7
        %v2175 = vsub.s32 0, %v2174
        %v2176 = vrot.slane %v2171, %v2175
        %v2177 = vadd.f32 %v2166, %v2176
        %2178 = vst [vmem:[%s542] sm:$0x1] %v2177
        %s2179 = sand.u32 %s289, 1
        %s2180 = scalar_lea.sflag [#allocation5], %s2179
        %s2181 = sand.u32 %s289, 1
        %s2182 = smul.addr %s2181, 128
        %s2183 = scalar_lea.vmem [#allocation14], %s2182
        %s2184 = sand.u32 %s315, 1
        %s2185 = scalar_lea.sflag [#allocation16], %s2184
        %s2186 = sand.u32 %s315, 1
        %s2187 = scalar_lea.vmem [#allocation15], %s2186
        // Predicated region
        $region89: #{tpu_custom_call.1} parent=63 // pred_check
          %p2188 = pneg %p299
        $region90: #{tpu_custom_call.1} parent=63 // pred_check_branch
          %2190 = sbr.rel (%p2188) target = $region92
        $region91: #{tpu_custom_call.1} parent=63 // pred_region
          %s2191 = smul.u32 16, %s40
          %s2193 = ssub.s32 2048, 2048
          %2194 = vsyncadd %s2180, %s2193
          %s2195 = smul.addr %s2191, 128
          %s2196 = scalar_lea.hbm %s11, %s2195
          %s2197 = sshll.u32 %s2183, 4
          %s2198 = int_to_ptr.vmem [resolvable:$true] %s2197
          %2203 = dma.vmem_to_hbm [thread:$0]  %s2198, 2048, %s2196, %s2180, 128, 128, 8
        $region92: #{tpu_custom_call.1} parent=63 // pred_fallthru
          _
        // Predicated region
        $region93: #{tpu_custom_call.1} parent=63 // pred_check
          %p2204 = pneg %p325
        $region94: #{tpu_custom_call.1} parent=63 // pred_check_branch
          %2206 = sbr.rel (%p2204) target = $region96
        $region95: #{tpu_custom_call.1} parent=63 // pred_region
          %s2208 = ssub.s32 16, 16
          %2209 = vsyncadd %s2185, %s2208
          %s2210 = smul.addr %s40, 16
          %s2211 = scalar_lea.hbm %s12, %s2210
          %s2213 = sshll.u32 %s2187, 4
          %s2214 = int_to_ptr.vmem [resolvable:$true] %s2213
          %2216 = dma.vmem_to_hbm [thread:$0]  %s2214, 16, %s2211, %s2185
        $region96: #{tpu_custom_call.1} parent=63 // pred_fallthru
          _
      $region64: #{tpu_custom_call.1} parent=5 // pred_fallthru
        _
      %p2217 = scmp.le.s32.totalorder 2, %s35
      // Predicated region
      $region97: #{tpu_custom_call.1} parent=5 // pred_check
        %p2218 = pneg %p2217
      $region98: #{tpu_custom_call.1} parent=5 // pred_check_branch
        %2220 = sbr.rel (%p2218) target = $region100
      $region99: #{tpu_custom_call.1} parent=5 // pred_region
        %s2221 = ssub.s32 %s35, 2
        // Predicated region
        $region101: #{tpu_custom_call.1} parent=99 // pred_check
          %p2222 = pneg %p305
        $region102: #{tpu_custom_call.1} parent=99 // pred_check_branch
          %2224 = sbr.rel (%p2222) target = $region104
        $region103: #{tpu_custom_call.1} parent=99 // pred_region
          %s2225 = sand.u32 %s290, 1
          %s2226 = scalar_lea.sflag [#allocation5], %s2225
          %s2227 = sand.u32 %s290, 1
          %s2228 = smul.addr %s2227, 128
          %s2229 = scalar_lea.vmem [#allocation14], %s2228
          %2230 = dma.done %s2226, 2048
        $region104: #{tpu_custom_call.1} parent=99 // pred_fallthru
          _
        // Predicated region
        $region105: #{tpu_custom_call.1} parent=99 // pred_check
          %p2231 = pneg %p331
        $region106: #{tpu_custom_call.1} parent=99 // pred_check_branch
          %2233 = sbr.rel (%p2231) target = $region108
        $region107: #{tpu_custom_call.1} parent=99 // pred_region
          %s2234 = sand.u32 %s316, 1
          %s2235 = scalar_lea.sflag [#allocation16], %s2234
          %s2236 = sand.u32 %s316, 1
          %s2237 = scalar_lea.vmem [#allocation15], %s2236
          %2238 = dma.done %s2235, 16
        $region108: #{tpu_custom_call.1} parent=99 // pred_fallthru
          _
      $region100: #{tpu_custom_call.1} parent=5 // pred_fallthru
        _
    $region6: #{tpu_custom_call.1} parent=1 // loop_footer
      %s39 = sadd.s32 1, %s35
    $region7: #{tpu_custom_call.1} parent=1 // loop_footer_branch
      %34 = sbr.rel target = $region3
    $region8: #{tpu_custom_call.1} parent=1 // loop_exit
      _
    %2239 = vsyncpa [#allocation4], 1
    %s2240 = scalar_lea.sflag [#allocation4], 1
    %2241 = vsyncpa %s2240, 1
    %2242 = vsyncpa [#allocation7], 1
    %s2243 = scalar_lea.sflag [#allocation7], 1
    %2244 = vsyncpa %s2243, 1
    %2245 = vsyncpa [#allocation10], 1
    %2246 = vsyncpa [#allocation13], 1
    %2247 = vsyncpa [#allocation5], 1
    %s2248 = scalar_lea.sflag [#allocation5], 1
    %2249 = vsyncpa %s2248, 1
    %2250 = vsyncpa [#allocation16], 1
    %s2251 = scalar_lea.sflag [#allocation16], 1
    %2252 = vsyncpa %s2251, 1

</llo_original>
